<compile_context>
chip_gen: v7x
topology: tpu7x:2x2x1
jax: 0.10.0
libtpu: 0.0.40
codegen_flags: <defaults>
</compile_context>

<pallas_src>
import functools

import jax
import jax.numpy as jnp
from jax.experimental import pallas as pl
from jax.experimental.pallas import tpu as pltpu


def _tensorcores_per_chip():
    """Best-effort query of TensorCores per chip; defaults to 1 (v5e/v6e)."""
    try:
        info = pltpu.get_tpu_info()
        for name in ("num_tensorcores", "tensorcore_count", "num_cores",
                     "cores_per_chip", "num_cores_per_chip"):
            v = getattr(info, name, None)
            if isinstance(v, int) and v > 0:
                return v
    except Exception:
        pass
    return 1


def _attention_kernel(x_ref, wq_ref, wk_ref, wv_ref, seg_ref, segT_ref,
                      wp_ref, pb_ref, o_ref, *, num_heads, b_block, seq_len):
    """Processes b_block batch elements (b_block * seq_len token rows) per step.

    x_ref    : (R, C)    token rows, R = b_block*N   (compute dtype, bf16)
    wq_ref   : (C, C)    Wq.T * scale (scale pre-folded)
    wk_ref   : (C, C)    Wk.T
    wv_ref   : (C, C)    Wv.T
    seg_ref  : (C, H)    0/1 head-segment matrix, seg[c,h] = 1 iff c//hd == h (f32)
    segT_ref : (H, C)    its transpose (f32)
    wp_ref   : (C, C)    output projection, pre-transposed to (in, out)
    pb_ref   : (1, C)    output projection bias (f32)
    o_ref    : (R, C)    output token rows
    """
    C = wp_ref.shape[0]
    H = num_heads
    N = seq_len
    R = b_block * N
    cdt = x_ref.dtype                     # MXU input dtype (bf16)

    x = x_ref[...]                                                       # (R, C)

    # (1) Q/K/V projections: three (R,C)@(C,C) MXU matmuls, C-deep contraction,
    #     f32 accumulation.  Separate weights -> no lane-offset slicing of a
    #     fused 96-lane result at C=32.  Softmax scale already folded into wq.
    q = jnp.dot(x, wq_ref[...], preferred_element_type=jnp.float32)      # (R, C)
    k = jnp.dot(x, wk_ref[...], preferred_element_type=jnp.float32)      # (R, C)
    v = jnp.dot(x, wv_ref[...], preferred_element_type=jnp.float32)      # (R, C)

    # Leading-dim split only (layout-free): (R, C) -> (b, N, C).
    q3 = q.reshape(b_block, N, C)
    k3 = k.reshape(b_block, N, C)
    v3 = v.reshape(b_block, N, C)

    # (2) Scores with NO per-head split:
    #     P[b,i,j,c] = q[b,i,c] * k[b,j,c]                (VPU, full-C lanes)
    #     S[b,i,j,h] = sum_c P[b,i,j,c] * seg[c,h]        (one MXU matmul,
    #                                                      contraction depth C)
    P = q3[:, :, None, :] * k3[:, None, :, :]                            # (b,N,N,C) f32
    S = jnp.dot(P.reshape(R * N, C), seg_ref[...],
                preferred_element_type=jnp.float32)                      # (R*N, H)
    S = S.reshape(b_block, N, N, H)

    # (3) Per-(batch, query, head) softmax over keys (axis=2, sublane axis).
    m = jnp.max(S, axis=2, keepdims=True)
    e = jnp.exp(S - m)
    l = jnp.sum(e, axis=2, keepdims=True)
    p = e * pl.reciprocal(l, approx=True)                                # EUP slot
    # NOTE: approx reciprocal => ~1e-3 relative error on the normalization;
    # acceptable for eval, use an exact divide if reused for training.

    # (4) Context, still head-split-free: broadcast head-probs back to C
    #     channels with the transposed segment matrix (one tiny MXU matmul),
    #     then a VPU multiply with V and a key-axis (sublane) reduction.
    Pb = jnp.dot(p.reshape(R * N, H), segT_ref[...],
                 preferred_element_type=jnp.float32)                     # (R*N, C)
    Pb = Pb.reshape(b_block, N, N, C)
    ctx = jnp.sum(Pb * v3[:, None, :, :], axis=2)                        # (b, N, C)
    ctx = ctx.reshape(R, C)

    # (5) ONE full-width output projection (R,C)@(C,C) + bias.
    out = jnp.dot(ctx.astype(cdt), wp_ref[...],
                  preferred_element_type=jnp.float32) + pb_ref[...]
    # NOTE: at C=32 / R=32 the output block is tiny; a lane-dense (b, N*C)
    # slab only pays off at production channel widths (see TODO at top).
    o_ref[...] = out.astype(o_ref.dtype)


def attention_pallas(x, params, *, num_heads, sr_ratio=1, b_block=None,
                     compute_dtype=jnp.bfloat16):
    """x: (B, N, C).  params hold PyTorch-convention weights."""
    if sr_ratio != 1:
        # TODO(synk): sr_ratio > 1 (strided Conv2d + LayerNorm on K/V) not implemented.
        raise NotImplementedError("attention_pallas only implements sr_ratio=1")

    B, N, C = x.shape
    assert C % num_heads == 0
    hd = C // num_heads
    scale = float(hd) ** -0.5

    # Explicit checkpoint-layout assertions (silent-garbage guard).
    assert params["q_w"].shape == (C, C), params["q_w"].shape
    assert params["kv_w"].shape == (2 * C, C), params["kv_w"].shape
    assert params["proj_w"].shape == (C, C), params["proj_w"].shape
    assert params["proj_b"].shape == (C,), params["proj_b"].shape

    # Generation-aware grid: single-TC chips (v5e/v6e) get one step (grid=(1,));
    # multi-TC chips (v7x) get two "parallel" steps when B splits evenly and the
    # per-step row block stays a multiple of 8 sublanes.
    if b_block is None:
        n_tc = _tensorcores_per_chip()
        if n_tc >= 2 and B % 2 == 0 and ((B // 2) * N) % 8 == 0:
            b_block = B // 2
        else:
            b_block = B
    assert B % b_block == 0

    # PyTorch nn.Linear stores W as (out, in); y = x @ W.T.  Pre-transpose,
    # fold the softmax scale into Wq (free at param-prep time), and split the
    # kv weight into its [k | v] halves.
    # NOTE: kv_w rows 0..C-1 are K, rows C..2C-1 are V (matches the PyTorch
    # reshape(B, -1, 2, heads, hd) layout).
    wq = (params["q_w"].T * scale).astype(compute_dtype)                 # (C, C)
    wk = params["kv_w"][:C, :].T.astype(compute_dtype)                   # (C, C)
    wv = params["kv_w"][C:, :].T.astype(compute_dtype)                   # (C, C)
    wp = params["proj_w"].T.astype(compute_dtype)                        # (C, C)
    pb = params["proj_b"].reshape(1, C).astype(jnp.float32)              # (1, C)

    # 0/1 head-segment matrix: seg[c, h] = 1 iff channel c belongs to head h.
    seg = (jnp.arange(C)[:, None] // hd ==
           jnp.arange(num_heads)[None, :]).astype(jnp.float32)           # (C, H)
    segT = seg.T                                                         # (H, C)

    # Flatten tokens to (B*N, C): each grid step sees a plain 2-D row block.
    x2 = x.reshape(B * N, C).astype(compute_dtype)
    rows = b_block * N

    kernel = functools.partial(_attention_kernel, num_heads=num_heads,
                               b_block=b_block, seq_len=N)

    out2 = pl.pallas_call(
        kernel,
        out_shape=jax.ShapeDtypeStruct((B * N, C), x.dtype),
        grid_spec=pltpu.PrefetchScalarGridSpec(
            num_scalar_prefetch=0,
            grid=(B // b_block,),
            in_specs=[
                pl.BlockSpec((rows, C), lambda i: (i, 0)),               # x rows
                pl.BlockSpec((C, C), lambda i: (0, 0)),                  # Wq*scale
                pl.BlockSpec((C, C), lambda i: (0, 0)),                  # Wk
                pl.BlockSpec((C, C), lambda i: (0, 0)),                  # Wv
                pl.BlockSpec((C, num_heads), lambda i: (0, 0)),          # seg
                pl.BlockSpec((num_heads, C), lambda i: (0, 0)),          # seg.T
                pl.BlockSpec((C, C), lambda i: (0, 0)),                  # Wproj
                pl.BlockSpec((1, C), lambda i: (0, 0)),                  # bias
            ],
            out_specs=pl.BlockSpec((rows, C), lambda i: (i, 0)),
        ),
        compiler_params=pltpu.CompilerParams(
            dimension_semantics=("parallel",)),
    )(x2, wq, wk, wv, seg, segT, wp, pb)
    return out2.reshape(B, N, C)


# ---- pure-JAX reference (mirrors the PyTorch forward, sr_ratio=1) ----------
def attention_ref(x, params, *, num_heads):
    B, N, C = x.shape
    hd = C // num_heads
    scale = float(hd) ** -0.5
    q = x @ params["q_w"].T                               # (B, N, C)
    kv = x @ params["kv_w"].T                             # (B, N, 2C)
    k, v = kv[..., :C], kv[..., C:]

    def split_heads(t):
        return t.reshape(B, N, num_heads, hd).transpose(0, 2, 1, 3)

    qh, kh, vh = split_heads(q), split_heads(k), split_heads(v)
    attn = (qh @ jnp.swapaxes(kh, -2, -1)) * scale
    attn = jax.nn.softmax(attn, axis=-1)
    out = (attn @ vh).transpose(0, 2, 1, 3).reshape(B, N, C)
    return out @ params["proj_w"].T + params["proj_b"]


if __name__ == "__main__":
    # Small shapes consistent with the module: dim=32, num_heads=8, seq N=H*W=16.
    B, C, num_heads = 2, 32, 8
    Hs, Ws = 4, 4
    N = Hs * Ws

    key = jax.random.PRNGKey(0)
    kx, kq, kkv, kp, kb = jax.random.split(key, 5)

    x = jax.random.normal(kx, (B, N, C), dtype=jnp.float32)
    params = {
        # PyTorch-convention shapes: Linear weight (out_features, in_features)
        "q_w": 0.02 * jax.random.normal(kq, (C, C), dtype=jnp.float32),
        "kv_w": 0.02 * jax.random.normal(kkv, (2 * C, C), dtype=jnp.float32),
        "proj_w": 0.02 * jax.random.normal(kp, (C, C), dtype=jnp.float32),
        "proj_b": 0.02 * jax.random.normal(kb, (C,), dtype=jnp.float32),
    }

    out = attention_pallas(x, params, num_heads=num_heads)
    out = jax.block_until_ready(out)

    ref = attention_ref(x, params, num_heads=num_heads)
    assert out.shape == (B, N, C)
    # bf16 MXU inputs + approx softmax reciprocal -> bf16-scale tolerance vs f32 ref.
    assert jnp.allclose(out, ref, atol=2e-3, rtol=2e-2), (
        f"max abs err = {jnp.max(jnp.abs(out - ref))}")

    print("KERNEL_OK")
</pallas_src>

<mosaic_0001>
module attributes {stable_mosaic.version = 11 : i64} {
  func.func @_attention_kernel(%arg0: i32, %arg1: memref<32x32xbf16, #tpu.memory_space<vmem>>, %arg2: memref<32x32xbf16, #tpu.memory_space<vmem>>, %arg3: memref<32x32xbf16, #tpu.memory_space<vmem>>, %arg4: memref<32x32xbf16, #tpu.memory_space<vmem>>, %arg5: memref<32x8xf32, #tpu.memory_space<vmem>>, %arg6: memref<8x32xf32, #tpu.memory_space<vmem>>, %arg7: memref<32x32xbf16, #tpu.memory_space<vmem>>, %arg8: memref<1x32xf32, #tpu.memory_space<vmem>>, %arg9: memref<32x32xf32, #tpu.memory_space<vmem>>) attributes {dimension_semantics = [#tpu.dimension_semantics<parallel>], iteration_bounds = array<i64: 1>, scalar_prefetch = 0 : i64, scratch_operands = 0 : i64, tpu.core_type = #tpu.core_type<tc>, window_params = [{transform_indices = @transform_0, window_bounds = array<i64: 32, 32>}, {pipeline_mode = #tpu.pipeline_mode<synchronous>, transform_indices = @transform_1, window_bounds = array<i64: 32, 32>}, {pipeline_mode = #tpu.pipeline_mode<synchronous>, transform_indices = @transform_2, window_bounds = array<i64: 32, 32>}, {pipeline_mode = #tpu.pipeline_mode<synchronous>, transform_indices = @transform_3, window_bounds = array<i64: 32, 32>}, {pipeline_mode = #tpu.pipeline_mode<synchronous>, transform_indices = @transform_4, window_bounds = array<i64: 32, 8>}, {pipeline_mode = #tpu.pipeline_mode<synchronous>, transform_indices = @transform_5, window_bounds = array<i64: 8, 32>}, {pipeline_mode = #tpu.pipeline_mode<synchronous>, transform_indices = @transform_6, window_bounds = array<i64: 32, 32>}, {pipeline_mode = #tpu.pipeline_mode<synchronous>, transform_indices = @transform_7, window_bounds = array<i64: 1, 32>}, {transform_indices = @transform_8, window_bounds = array<i64: 32, 32>}]} {
    %c0 = arith.constant 0 : index
    %c0_0 = arith.constant 0 : index
    %0 = vector.load %arg1[%c0, %c0_0] : memref<32x32xbf16, #tpu.memory_space<vmem>>, vector<32x32xbf16>
    %c0_1 = arith.constant 0 : index
    %c0_2 = arith.constant 0 : index
    %1 = vector.load %arg2[%c0_1, %c0_2] : memref<32x32xbf16, #tpu.memory_space<vmem>>, vector<32x32xbf16>
    %cst = arith.constant dense<0.000000e+00> : vector<32x32xf32>
    %2 = tpu.matmul %0, %1, %cst {dimension_numbers = #tpu.dot_dimension_numbers<[1], [0], [0], [1], [0, 0, 1, 1], [], []>} : vector<32x32xbf16>, vector<32x32xbf16>, vector<32x32xf32> -> vector<32x32xf32>
    %c0_3 = arith.constant 0 : index
    %c0_4 = arith.constant 0 : index
    %3 = vector.load %arg3[%c0_3, %c0_4] : memref<32x32xbf16, #tpu.memory_space<vmem>>, vector<32x32xbf16>
    %cst_5 = arith.constant dense<0.000000e+00> : vector<32x32xf32>
    %4 = tpu.matmul %0, %3, %cst_5 {dimension_numbers = #tpu.dot_dimension_numbers<[1], [0], [0], [1], [0, 0, 1, 1], [], []>} : vector<32x32xbf16>, vector<32x32xbf16>, vector<32x32xf32> -> vector<32x32xf32>
    %c0_6 = arith.constant 0 : index
    %c0_7 = arith.constant 0 : index
    %5 = vector.load %arg4[%c0_6, %c0_7] : memref<32x32xbf16, #tpu.memory_space<vmem>>, vector<32x32xbf16>
    %cst_8 = arith.constant dense<0.000000e+00> : vector<32x32xf32>
    %6 = tpu.matmul %0, %5, %cst_8 {dimension_numbers = #tpu.dot_dimension_numbers<[1], [0], [0], [1], [0, 0, 1, 1], [], []>} : vector<32x32xbf16>, vector<32x32xbf16>, vector<32x32xf32> -> vector<32x32xf32>
    %7 = vector.shape_cast %2 : vector<32x32xf32> to vector<2x16x32xf32>
    %8 = vector.shape_cast %4 : vector<32x32xf32> to vector<2x16x32xf32>
    %9 = vector.shape_cast %6 : vector<32x32xf32> to vector<2x16x32xf32>
    %10 = vector.shape_cast %7 : vector<2x16x32xf32> to vector<2x16x1x32xf32>
    %11 = vector.shape_cast %8 : vector<2x16x32xf32> to vector<2x1x16x32xf32>
    %12 = vector.broadcast %10 : vector<2x16x1x32xf32> to vector<2x16x16x32xf32>
    %13 = vector.broadcast %11 : vector<2x1x16x32xf32> to vector<2x16x16x32xf32>
    %14 = arith.mulf %12, %13 : vector<2x16x16x32xf32>
    %15 = vector.shape_cast %14 : vector<2x16x16x32xf32> to vector<512x32xf32>
    %c0_9 = arith.constant 0 : index
    %c0_10 = arith.constant 0 : index
    %16 = vector.load %arg5[%c0_9, %c0_10] : memref<32x8xf32, #tpu.memory_space<vmem>>, vector<32x8xf32>
    %cst_11 = arith.constant dense<0.000000e+00> : vector<512x8xf32>
    %17 = tpu.matmul %15, %16, %cst_11 {dimension_numbers = #tpu.dot_dimension_numbers<[1], [0], [0], [1], [0, 0, 1, 1], [], []>} : vector<512x32xf32>, vector<32x8xf32>, vector<512x8xf32> -> vector<512x8xf32>
    %18 = vector.shape_cast %17 : vector<512x8xf32> to vector<2x16x16x8xf32>
    %cst_12 = arith.constant dense<0xFF800000> : vector<2x16x8xf32>
    %19 = vector.multi_reduction <maximumf>, %18, %cst_12 [2] : vector<2x16x16x8xf32> to vector<2x16x8xf32>
    %20 = vector.shape_cast %19 : vector<2x16x8xf32> to vector<2x16x1x8xf32>
    %21 = vector.broadcast %20 : vector<2x16x1x8xf32> to vector<2x16x16x8xf32>
    %22 = arith.subf %18, %21 : vector<2x16x16x8xf32>
    %23 = math.exp %22 : vector<2x16x16x8xf32>
    %cst_13 = arith.constant dense<0.000000e+00> : vector<2x16x8xf32>
    %24 = vector.multi_reduction <add>, %23, %cst_13 [2] : vector<2x16x16x8xf32> to vector<2x16x8xf32>
    %25 = vector.shape_cast %24 : vector<2x16x8xf32> to vector<2x16x1x8xf32>
    %26 = tpu.reciprocal %25 {approx = true} : vector<2x16x1x8xf32> -> vector<2x16x1x8xf32>
    %27 = vector.broadcast %26 : vector<2x16x1x8xf32> to vector<2x16x16x8xf32>
    %28 = arith.mulf %23, %27 : vector<2x16x16x8xf32>
    %29 = vector.shape_cast %28 : vector<2x16x16x8xf32> to vector<512x8xf32>
    %c0_14 = arith.constant 0 : index
    %c0_15 = arith.constant 0 : index
    %30 = vector.load %arg6[%c0_14, %c0_15] : memref<8x32xf32, #tpu.memory_space<vmem>>, vector<8x32xf32>
    %cst_16 = arith.constant dense<0.000000e+00> : vector<512x32xf32>
    %31 = tpu.matmul %29, %30, %cst_16 {dimension_numbers = #tpu.dot_dimension_numbers<[1], [0], [0], [1], [0, 0, 1, 1], [], []>} : vector<512x8xf32>, vector<8x32xf32>, vector<512x32xf32> -> vector<512x32xf32>
    %32 = vector.shape_cast %31 : vector<512x32xf32> to vector<2x16x16x32xf32>
    %33 = vector.shape_cast %9 : vector<2x16x32xf32> to vector<2x1x16x32xf32>
    %34 = vector.broadcast %33 : vector<2x1x16x32xf32> to vector<2x16x16x32xf32>
    %35 = arith.mulf %32, %34 : vector<2x16x16x32xf32>
    %cst_17 = arith.constant dense<0.000000e+00> : vector<2x16x32xf32>
    %36 = vector.multi_reduction <add>, %35, %cst_17 [2] : vector<2x16x16x32xf32> to vector<2x16x32xf32>
    %37 = vector.shape_cast %36 : vector<2x16x32xf32> to vector<32x32xf32>
    %38 = arith.truncf %37 : vector<32x32xf32> to vector<32x32xbf16>
    %c0_18 = arith.constant 0 : index
    %c0_19 = arith.constant 0 : index
    %39 = vector.load %arg7[%c0_18, %c0_19] : memref<32x32xbf16, #tpu.memory_space<vmem>>, vector<32x32xbf16>
    %cst_20 = arith.constant dense<0.000000e+00> : vector<32x32xf32>
    %40 = tpu.matmul %38, %39, %cst_20 {dimension_numbers = #tpu.dot_dimension_numbers<[1], [0], [0], [1], [0, 0, 1, 1], [], []>} : vector<32x32xbf16>, vector<32x32xbf16>, vector<32x32xf32> -> vector<32x32xf32>
    %c0_21 = arith.constant 0 : index
    %c0_22 = arith.constant 0 : index
    %41 = vector.load %arg8[%c0_21, %c0_22] : memref<1x32xf32, #tpu.memory_space<vmem>>, vector<1x32xf32>
    %42 = vector.broadcast %41 : vector<1x32xf32> to vector<32x32xf32>
    %43 = arith.addf %40, %42 : vector<32x32xf32>
    %c0_23 = arith.constant 0 : index
    %c0_24 = arith.constant 0 : index
    %44 = vector.load %arg9[%c0_23, %c0_24] : memref<32x32xf32, #tpu.memory_space<vmem>>, vector<32x32xf32>
    tpu.vector_store %arg9[%c0_23, %c0_24], %43 {strides = array<i32>} : memref<32x32xf32, #tpu.memory_space<vmem>>, vector<32x32xf32>,
    return
  }
  func.func @transform_0(%arg0: i32) -> (i32, i32) {
    %c0_i32 = arith.constant 0 : i32
    %c0_i32_0 = arith.constant 0 : i32
    return %arg0, %c0_i32 : i32, i32
  }
  func.func @transform_1(%arg0: i32) -> (i32, i32) {
    %c0_i32 = arith.constant 0 : i32
    %c0_i32_0 = arith.constant 0 : i32
    %c0_i32_1 = arith.constant 0 : i32
    return %c0_i32, %c0_i32_0 : i32, i32
  }
  func.func @transform_2(%arg0: i32) -> (i32, i32) {
    %c0_i32 = arith.constant 0 : i32
    %c0_i32_0 = arith.constant 0 : i32
    %c0_i32_1 = arith.constant 0 : i32
    return %c0_i32, %c0_i32_0 : i32, i32
  }
  func.func @transform_3(%arg0: i32) -> (i32, i32) {
    %c0_i32 = arith.constant 0 : i32
    %c0_i32_0 = arith.constant 0 : i32
    %c0_i32_1 = arith.constant 0 : i32
    return %c0_i32, %c0_i32_0 : i32, i32
  }
  func.func @transform_4(%arg0: i32) -> (i32, i32) {
    %c0_i32 = arith.constant 0 : i32
    %c0_i32_0 = arith.constant 0 : i32
    %c0_i32_1 = arith.constant 0 : i32
    return %c0_i32, %c0_i32_0 : i32, i32
  }
  func.func @transform_5(%arg0: i32) -> (i32, i32) {
    %c0_i32 = arith.constant 0 : i32
    %c0_i32_0 = arith.constant 0 : i32
    %c0_i32_1 = arith.constant 0 : i32
    return %c0_i32, %c0_i32_0 : i32, i32
  }
  func.func @transform_6(%arg0: i32) -> (i32, i32) {
    %c0_i32 = arith.constant 0 : i32
    %c0_i32_0 = arith.constant 0 : i32
    %c0_i32_1 = arith.constant 0 : i32
    return %c0_i32, %c0_i32_0 : i32, i32
  }
  func.func @transform_7(%arg0: i32) -> (i32, i32) {
    %c0_i32 = arith.constant 0 : i32
    %c0_i32_0 = arith.constant 0 : i32
    %c0_i32_1 = arith.constant 0 : i32
    return %c0_i32, %c0_i32_0 : i32, i32
  }
  func.func @transform_8(%arg0: i32) -> (i32, i32) {
    %c0_i32 = arith.constant 0 : i32
    %c0_i32_0 = arith.constant 0 : i32
    return %arg0, %c0_i32 : i32, i32
  }
}

</mosaic_0001>

<llo_original>
// kernel: tpu_custom_call.1
$region0: #{tpu_custom_call.1}
  #allocation0 [shape = 'u32[]', space=smem, size = 0x4, offset = 0x4, fixed_abs, tag = 'smem constant byte address 0x4 - core index']
  #allocation1 [shape = 'u32[144,128]{1,0:T(1,128)}', space=vmem, size = 0x12000, scoped, tag = 'internal scratch']
  %s0 = inlined_call_operand.vmem [shape: bf16[32,32], index: 0, kind: input, shape index: {}]
  %s1 = inlined_call_operand.vmem [shape: bf16[32,32], index: 1, kind: input, shape index: {}]
  %s2 = inlined_call_operand.hbm [shape: bf16[32,32], index: 2, kind: input, shape index: {}]
  %s3 = inlined_call_operand.vmem [shape: bf16[32,32], index: 3, kind: input, shape index: {}]
  %s4 = inlined_call_operand.vmem [shape: f32[32,8], index: 4, kind: input, shape index: {}]
  %s5 = inlined_call_operand.vmem [shape: f32[8,32], index: 5, kind: input, shape index: {}]
  %s6 = inlined_call_operand.hbm [shape: bf16[32,32], index: 6, kind: input, shape index: {}]
  %s7 = inlined_call_operand.vmem [shape: f32[1,32], index: 7, kind: input, shape index: {}]
  %s8 = inlined_call_operand.hbm [shape: f32[32,32], index: 8, kind: output, shape index: {}]
  %s9 = sld [smem:[#allocation0]]
  $region50: #{tpu_custom_call.1} parent=0
    _
  %s11 = ssub.s32 1, %s9
  %s12 = scalar_select 0, %s11, %s9
  $region1: #{tpu_custom_call.1} parent=0
    #allocation2 [shape = 'u8[8192]{0}', space=vmem, size = 0x2000, scoped, tag = 'input window, operand 2, single buffered']
    #allocation3 [shape = 's32[1]{0}', space=sflag, size = 0x4, scoped, tag = 'scoped memory for tpu_custom_call.1']
    #allocation4 [shape = 's32[1]{0}', space=sflag, size = 0x4, scoped, tag = 'scoped memory for tpu_custom_call.1']
    #allocation5 [shape = 'u8[8192]{0}', space=vmem, size = 0x2000, scoped, tag = 'input window, operand 6, single buffered']
    #allocation6 [shape = 's32[1]{0}', space=sflag, size = 0x4, scoped, tag = 'scoped memory for tpu_custom_call.1']
    #allocation7 [shape = 'u8[16384]{0}', space=vmem, size = 0x4000, scoped, tag = 'output window, operand 0, single buffered']
    %13 = vsyncpa [#allocation3], 0
    %14 = vsyncpa [#allocation6], 0
    %15 = vsyncpa [#allocation4], 0
    // Predicated region
    $region2: #{tpu_custom_call.1} parent=1 // pred_check
      _
    $region3: #{tpu_custom_call.1} parent=1 // pred_check_branch
      %17 = sbr.rel (0) target = $region5
    $region4: #{tpu_custom_call.1} parent=1 // pred_region
      _
    $region5: #{tpu_custom_call.1} parent=1 // pred_fallthru
      _
    // Predicated region
    $region6: #{tpu_custom_call.1} parent=1 // pred_check
      _
    $region7: #{tpu_custom_call.1} parent=1 // pred_check_branch
      %19 = sbr.rel (0) target = $region9
    $region8: #{tpu_custom_call.1} parent=1 // pred_region
      _
    $region9: #{tpu_custom_call.1} parent=1 // pred_fallthru
      _
    // Predicated region
    $region10: #{tpu_custom_call.1} parent=1 // pred_check
      _
    $region11: #{tpu_custom_call.1} parent=1 // pred_check_branch
      %21 = sbr.rel (0) target = $region13
    $region12: #{tpu_custom_call.1} parent=1 // pred_region
      %s23 = ssub.s32 256, 256
      %24 = vsyncadd [#allocation3], %s23
      %s25 = sshll.u32 [#allocation2], 4
      %s26 = int_to_ptr.vmem [resolvable:$true] %s25
      %31 = dma.hbm_to_vmem [thread:$0]  %s2, 256, %s26, [#allocation3], 64, 64, 4
    $region13: #{tpu_custom_call.1} parent=1 // pred_fallthru
      _
    // Predicated region
    $region14: #{tpu_custom_call.1} parent=1 // pred_check
      _
    $region15: #{tpu_custom_call.1} parent=1 // pred_check_branch
      %33 = sbr.rel (0) target = $region17
    $region16: #{tpu_custom_call.1} parent=1 // pred_region
      _
    $region17: #{tpu_custom_call.1} parent=1 // pred_fallthru
      _
    // Predicated region
    $region18: #{tpu_custom_call.1} parent=1 // pred_check
      _
    $region19: #{tpu_custom_call.1} parent=1 // pred_check_branch
      %35 = sbr.rel (0) target = $region21
    $region20: #{tpu_custom_call.1} parent=1 // pred_region
      _
    $region21: #{tpu_custom_call.1} parent=1 // pred_fallthru
      _
    // Predicated region
    $region22: #{tpu_custom_call.1} parent=1 // pred_check
      _
    $region23: #{tpu_custom_call.1} parent=1 // pred_check_branch
      %37 = sbr.rel (0) target = $region25
    $region24: #{tpu_custom_call.1} parent=1 // pred_region
      _
    $region25: #{tpu_custom_call.1} parent=1 // pred_fallthru
      _
    // Predicated region
    $region26: #{tpu_custom_call.1} parent=1 // pred_check
      _
    $region27: #{tpu_custom_call.1} parent=1 // pred_check_branch
      %39 = sbr.rel (0) target = $region29
    $region28: #{tpu_custom_call.1} parent=1 // pred_region
      %s41 = ssub.s32 256, 256
      %42 = vsyncadd [#allocation6], %s41
      %s43 = sshll.u32 [#allocation5], 4
      %s44 = int_to_ptr.vmem [resolvable:$true] %s43
      %49 = dma.hbm_to_vmem [thread:$0]  %s6, 256, %s44, [#allocation6], 64, 64, 4
    $region29: #{tpu_custom_call.1} parent=1 // pred_fallthru
      _
    // Predicated region
    $region30: #{tpu_custom_call.1} parent=1 // pred_check
      _
    $region31: #{tpu_custom_call.1} parent=1 // pred_check_branch
      %51 = sbr.rel (0) target = $region33
    $region32: #{tpu_custom_call.1} parent=1 // pred_region
      _
    $region33: #{tpu_custom_call.1} parent=1 // pred_fallthru
      _
    // Predicated region
    $region34: #{tpu_custom_call.1} parent=1 // pred_check
      _
    $region35: #{tpu_custom_call.1} parent=1 // pred_check_branch
      %53 = sbr.rel (0) target = $region37
    $region36: #{tpu_custom_call.1} parent=1 // pred_region
      %54 = dma.done [#allocation3], 256
    $region37: #{tpu_custom_call.1} parent=1 // pred_fallthru
      _
    // Predicated region
    $region38: #{tpu_custom_call.1} parent=1 // pred_check
      _
    $region39: #{tpu_custom_call.1} parent=1 // pred_check_branch
      %56 = sbr.rel (0) target = $region41
    $region40: #{tpu_custom_call.1} parent=1 // pred_region
      %57 = dma.done [#allocation6], 256
    $region41: #{tpu_custom_call.1} parent=1 // pred_fallthru
      _
    %v59 = vld [vmem:[%s0] sm:$0xf]
    %v60 = vld [vmem:[%s0 + $0x4] sm:$0xf]
    %v61 = vld [vmem:[%s0 + $0x8] sm:$0xf]
    %v62 = vld [vmem:[%s0 + $0xc] sm:$0xf]
    %v63 = vld [vmem:[%s1] sm:$0xf]
    %v64 = vld [vmem:[%s1 + $0x4] sm:$0xf]
    %v65 = vld [vmem:[%s1 + $0x8] sm:$0xf]
    %v66 = vld [vmem:[%s1 + $0xc] sm:$0xf]
    %v71 = vunpack.c.l.b16 %v59
    %v72 = vunpack.c.l.b16 %v60
    %v73 = vunpack.c.l.b16 %v61
    %v74 = vunpack.c.l.b16 %v62
    %v75 = vpack.c.b16 %v72, %v71
    %v76 = vpack.c.b16 %v74, %v73
    %v81 = vunpack.c.l.b16 %v63
    %v82 = vunpack.c.l.b16 %v64
    %v83 = vunpack.c.l.b16 %v65
    %v84 = vunpack.c.l.b16 %v66
    %v85 = vpack.c.b16 %v82, %v81
    %v86 = vpack.c.b16 %v84, %v83
    %vm89 = vcmask 261120
    %v91 = vsel %vm89, %v75, 0
    %v94 = vsel %vm89, %v76, 0
    %96 = vmatprep.subr.bf16.mxu0 0
    %97 = vmatpush1.bf16.msra.mxu0 %v85
    %98 = vmatprep.subr.bf16.mxu0 0
    %99 = vmatpush1.bf16.msra.mxu0 %v86
    %100 = vmatprep.subr.bf16.mxu0 0
    %101 = vmatpush1.bf16.msra.mxu0 0
    %102 = vmatprep.subr.bf16.mxu0 0
    %103 = vmatpush1.bf16.msra.mxu0 0
    %104 = vmatprep.subr.bf16.mxu0 0
    %105 = vmatpush1.bf16.msra.mxu0 0
    %106 = vmatprep.subr.bf16.mxu0 0
    %107 = vmatpush1.bf16.msra.mxu0 0
    %108 = vmatprep.subr.bf16.mxu0 0
    %109 = vmatpush1.bf16.msra.mxu0 0
    %110 = vmatprep.subr.bf16.mxu0 0
    %111 = vmatpush1.bf16.msra.mxu0 0
    %112 = vmatprep.subr.bf16.mxu0 0
    %113 = vmatpush1.bf16.msra.mxu0 0
    %114 = vmatprep.subr.bf16.mxu0 0
    %115 = vmatpush1.bf16.msra.mxu0 0
    %116 = vmatprep.subr.bf16.mxu0 0
    %117 = vmatpush1.bf16.msra.mxu0 0
    %118 = vmatprep.subr.bf16.mxu0 0
    %119 = vmatpush1.bf16.msra.mxu0 0
    %120 = vmatprep.subr.bf16.mxu0 0
    %121 = vmatpush1.bf16.msra.mxu0 0
    %122 = vmatprep.subr.bf16.mxu0 0
    %123 = vmatpush1.bf16.msra.mxu0 0
    %124 = vmatprep.subr.bf16.mxu0 0
    %125 = vmatpush1.bf16.msra.mxu0 0
    %126 = vmatprep.subr.bf16.mxu0 0
    %127 = vmatpush1.bf16.msra.mxu0 0
    %128 = vmatprep.mubr.bf16.mxu0 0
    %129 = vmatmul.mubr.bf16.gmra.mrb[0].mxu0 %v91
    %v130 = vpop.f32.mrb[0].mxu0
    %v131 = vadd.f32 0.0, %v130
    %v132 = vpop.f32.mrb[0].mxu0
    %v133 = vpop.f32.mrb[0].mxu0
    %v134 = vadd.f32 0.0, %v133
    %v135 = vpop.f32.mrb[0].mxu0
    %136 = vmatprep.mubr.bf16.mxu0 0
    %137 = vmatmul.mubr.bf16.gmra.mrb[0].mxu0 %v94
    %v138 = vpop.f32.mrb[0].mxu0
    %v139 = vadd.f32 0.0, %v138
    %v140 = vpop.f32.mrb[0].mxu0
    %v141 = vpop.f32.mrb[0].mxu0
    %v142 = vadd.f32 0.0, %v141
    %v143 = vpop.f32.mrb[0].mxu0
    %144 = vdwg.mxu0
    %v145 = vld [vmem:[#allocation2] sm:$0xf]
    %v146 = vld [vmem:[#allocation2 + $0x4] sm:$0xf]
    %v147 = vld [vmem:[#allocation2 + $0x8] sm:$0xf]
    %v148 = vld [vmem:[#allocation2 + $0xc] sm:$0xf]
    %v153 = vunpack.c.l.b16 %v145
    %v154 = vunpack.c.l.b16 %v146
    %v155 = vunpack.c.l.b16 %v147
    %v156 = vunpack.c.l.b16 %v148
    %v157 = vpack.c.b16 %v154, %v153
    %v158 = vpack.c.b16 %v156, %v155
    %161 = vmatprep.subr.bf16.mxu0 0
    %162 = vmatpush1.bf16.msra.mxu0 %v157
    %163 = vmatprep.subr.bf16.mxu0 0
    %164 = vmatpush1.bf16.msra.mxu0 %v158
    %165 = vmatprep.subr.bf16.mxu0 0
    %166 = vmatpush1.bf16.msra.mxu0 0
    %167 = vmatprep.subr.bf16.mxu0 0
    %168 = vmatpush1.bf16.msra.mxu0 0
    %169 = vmatprep.subr.bf16.mxu0 0
    %170 = vmatpush1.bf16.msra.mxu0 0
    %171 = vmatprep.subr.bf16.mxu0 0
    %172 = vmatpush1.bf16.msra.mxu0 0
    %173 = vmatprep.subr.bf16.mxu0 0
    %174 = vmatpush1.bf16.msra.mxu0 0
    %175 = vmatprep.subr.bf16.mxu0 0
    %176 = vmatpush1.bf16.msra.mxu0 0
    %177 = vmatprep.subr.bf16.mxu0 0
    %178 = vmatpush1.bf16.msra.mxu0 0
    %179 = vmatprep.subr.bf16.mxu0 0
    %180 = vmatpush1.bf16.msra.mxu0 0
    %181 = vmatprep.subr.bf16.mxu0 0
    %182 = vmatpush1.bf16.msra.mxu0 0
    %183 = vmatprep.subr.bf16.mxu0 0
    %184 = vmatpush1.bf16.msra.mxu0 0
    %185 = vmatprep.subr.bf16.mxu0 0
    %186 = vmatpush1.bf16.msra.mxu0 0
    %187 = vmatprep.subr.bf16.mxu0 0
    %188 = vmatpush1.bf16.msra.mxu0 0
    %189 = vmatprep.subr.bf16.mxu0 0
    %190 = vmatpush1.bf16.msra.mxu0 0
    %191 = vmatprep.subr.bf16.mxu0 0
    %192 = vmatpush1.bf16.msra.mxu0 0
    %193 = vmatprep.mubr.bf16.mxu0 0
    %194 = vmatmul.mubr.bf16.gmra.mrb[0].mxu0 %v91
    %v195 = vpop.f32.mrb[0].mxu0
    %v196 = vadd.f32 0.0, %v195
    %v197 = vpop.f32.mrb[0].mxu0
    %v198 = vpop.f32.mrb[0].mxu0
    %v199 = vadd.f32 0.0, %v198
    %v200 = vpop.f32.mrb[0].mxu0
    %201 = vmatprep.mubr.bf16.mxu0 0
    %202 = vmatmul.mubr.bf16.gmra.mrb[0].mxu0 %v94
    %v203 = vpop.f32.mrb[0].mxu0
    %v204 = vadd.f32 0.0, %v203
    %v205 = vpop.f32.mrb[0].mxu0
    %v206 = vpop.f32.mrb[0].mxu0
    %v207 = vadd.f32 0.0, %v206
    %v208 = vpop.f32.mrb[0].mxu0
    %209 = vdwg.mxu0
    %v210 = vld [vmem:[%s3] sm:$0xf]
    %v211 = vld [vmem:[%s3 + $0x4] sm:$0xf]
    %v212 = vld [vmem:[%s3 + $0x8] sm:$0xf]
    %v213 = vld [vmem:[%s3 + $0xc] sm:$0xf]
    %v218 = vunpack.c.l.b16 %v210
    %v219 = vunpack.c.l.b16 %v211
    %v220 = vunpack.c.l.b16 %v212
    %v221 = vunpack.c.l.b16 %v213
    %v222 = vpack.c.b16 %v219, %v218
    %v223 = vpack.c.b16 %v221, %v220
    %226 = vmatprep.subr.bf16.mxu0 0
    %227 = vmatpush1.bf16.msra.mxu0 %v222
    %228 = vmatprep.subr.bf16.mxu0 0
    %229 = vmatpush1.bf16.msra.mxu0 %v223
    %230 = vmatprep.subr.bf16.mxu0 0
    %231 = vmatpush1.bf16.msra.mxu0 0
    %232 = vmatprep.subr.bf16.mxu0 0
    %233 = vmatpush1.bf16.msra.mxu0 0
    %234 = vmatprep.subr.bf16.mxu0 0
    %235 = vmatpush1.bf16.msra.mxu0 0
    %236 = vmatprep.subr.bf16.mxu0 0
    %237 = vmatpush1.bf16.msra.mxu0 0
    %238 = vmatprep.subr.bf16.mxu0 0
    %239 = vmatpush1.bf16.msra.mxu0 0
    %240 = vmatprep.subr.bf16.mxu0 0
    %241 = vmatpush1.bf16.msra.mxu0 0
    %242 = vmatprep.subr.bf16.mxu0 0
    %243 = vmatpush1.bf16.msra.mxu0 0
    %244 = vmatprep.subr.bf16.mxu0 0
    %245 = vmatpush1.bf16.msra.mxu0 0
    %246 = vmatprep.subr.bf16.mxu0 0
    %247 = vmatpush1.bf16.msra.mxu0 0
    %248 = vmatprep.subr.bf16.mxu0 0
    %249 = vmatpush1.bf16.msra.mxu0 0
    %250 = vmatprep.subr.bf16.mxu0 0
    %251 = vmatpush1.bf16.msra.mxu0 0
    %252 = vmatprep.subr.bf16.mxu0 0
    %253 = vmatpush1.bf16.msra.mxu0 0
    %254 = vmatprep.subr.bf16.mxu0 0
    %255 = vmatpush1.bf16.msra.mxu0 0
    %256 = vmatprep.subr.bf16.mxu0 0
    %257 = vmatpush1.bf16.msra.mxu0 0
    %258 = vmatprep.mubr.bf16.mxu0 0
    %259 = vmatmul.mubr.bf16.gmra.mrb[0].mxu0 %v91
    %v260 = vpop.f32.mrb[0].mxu0
    %v261 = vadd.f32 0.0, %v260
    %v262 = vpop.f32.mrb[0].mxu0
    %v263 = vpop.f32.mrb[0].mxu0
    %v264 = vadd.f32 0.0, %v263
    %v265 = vpop.f32.mrb[0].mxu0
    %266 = vmatprep.mubr.bf16.mxu0 0
    %267 = vmatmul.mubr.bf16.gmra.mrb[0].mxu0 %v94
    %v268 = vpop.f32.mrb[0].mxu0
    %v269 = vadd.f32 0.0, %v268
    %v270 = vpop.f32.mrb[0].mxu0
    %v271 = vpop.f32.mrb[0].mxu0
    %v272 = vadd.f32 0.0, %v271
    %v273 = vpop.f32.mrb[0].mxu0
    %274 = vdwg.mxu0
    %v279 = vcombine.high %v131, %v131
    %v281 = vunpack.c.l.s4 1966171168
    %v282 = vunpack.c.0.s8 %v281
    %v283 = vlaneseq
    %v284 = vshrl.u32 %v283, 7
    %v285 = vsub.s32 %v282, %v284
    %v286 = vrot.slane %v131, %v285
    %v288 = vunpack.c.l.s4 1966171168
    %v289 = vunpack.c.0.s8 %v288
    %v290 = vlaneseq
    %v291 = vshrl.u32 %v290, 7
    %v292 = vsub.s32 %v289, %v291
    %v293 = vrot.slane %v279, %v292
    %v294 = vcombine.high %v286, %v286
    %v295 = vcombine.high %v293, %v293
    %v297 = vunpack.c.l.s4 1966171168
    %v298 = vunpack.c.0.s8 %v297
    %v299 = vlaneseq
    %v300 = vshrl.u32 %v299, 7
    %v301 = vsub.s32 %v298, %v300
    %v302 = vrot.slane %v286, %v301
    %v304 = vunpack.c.l.s4 1966171168
    %v305 = vunpack.c.0.s8 %v304
    %v306 = vlaneseq
    %v307 = vshrl.u32 %v306, 7
    %v308 = vsub.s32 %v305, %v307
    %v309 = vrot.slane %v293, %v308
    %v311 = vunpack.c.l.s4 1966171168
    %v312 = vunpack.c.0.s8 %v311
    %v313 = vlaneseq
    %v314 = vshrl.u32 %v313, 7
    %v315 = vsub.s32 %v312, %v314
    %v316 = vrot.slane %v294, %v315
    %v318 = vunpack.c.l.s4 1966171168
    %v319 = vunpack.c.0.s8 %v318
    %v320 = vlaneseq
    %v321 = vshrl.u32 %v320, 7
    %v322 = vsub.s32 %v319, %v321
    %v323 = vrot.slane %v295, %v322
    %v324 = vcombine.high %v302, %v302
    %v325 = vcombine.high %v309, %v309
    %v326 = vcombine.high %v316, %v316
    %v327 = vcombine.high %v323, %v323
    %v328 = vcombine.high %v134, %v134
    %v330 = vunpack.c.l.s4 1966171168
    %v331 = vunpack.c.0.s8 %v330
    %v332 = vlaneseq
    %v333 = vshrl.u32 %v332, 7
    %v334 = vsub.s32 %v331, %v333
    %v335 = vrot.slane %v134, %v334
    %v337 = vunpack.c.l.s4 1966171168
    %v338 = vunpack.c.0.s8 %v337
    %v339 = vlaneseq
    %v340 = vshrl.u32 %v339, 7
    %v341 = vsub.s32 %v338, %v340
    %v342 = vrot.slane %v328, %v341
    %v343 = vcombine.high %v335, %v335
    %v344 = vcombine.high %v342, %v342
    %v346 = vunpack.c.l.s4 1966171168
    %v347 = vunpack.c.0.s8 %v346
    %v348 = vlaneseq
    %v349 = vshrl.u32 %v348, 7
    %v350 = vsub.s32 %v347, %v349
    %v351 = vrot.slane %v335, %v350
    %v353 = vunpack.c.l.s4 1966171168
    %v354 = vunpack.c.0.s8 %v353
    %v355 = vlaneseq
    %v356 = vshrl.u32 %v355, 7
    %v357 = vsub.s32 %v354, %v356
    %v358 = vrot.slane %v342, %v357
    %v360 = vunpack.c.l.s4 1966171168
    %v361 = vunpack.c.0.s8 %v360
    %v362 = vlaneseq
    %v363 = vshrl.u32 %v362, 7
    %v364 = vsub.s32 %v361, %v363
    %v365 = vrot.slane %v343, %v364
    %v367 = vunpack.c.l.s4 1966171168
    %v368 = vunpack.c.0.s8 %v367
    %v369 = vlaneseq
    %v370 = vshrl.u32 %v369, 7
    %v371 = vsub.s32 %v368, %v370
    %v372 = vrot.slane %v344, %v371
    %v373 = vcombine.high %v351, %v351
    %v374 = vcombine.high %v358, %v358
    %v375 = vcombine.high %v365, %v365
    %v376 = vcombine.high %v372, %v372
    %v377 = vcombine.high %v139, %v139
    %v379 = vunpack.c.l.s4 1966171168
    %v380 = vunpack.c.0.s8 %v379
    %v381 = vlaneseq
    %v382 = vshrl.u32 %v381, 7
    %v383 = vsub.s32 %v380, %v382
    %v384 = vrot.slane %v139, %v383
    %v386 = vunpack.c.l.s4 1966171168
    %v387 = vunpack.c.0.s8 %v386
    %v388 = vlaneseq
    %v389 = vshrl.u32 %v388, 7
    %v390 = vsub.s32 %v387, %v389
    %v391 = vrot.slane %v377, %v390
    %v392 = vcombine.high %v384, %v384
    %v393 = vcombine.high %v391, %v391
    %v395 = vunpack.c.l.s4 1966171168
    %v396 = vunpack.c.0.s8 %v395
    %v397 = vlaneseq
    %v398 = vshrl.u32 %v397, 7
    %v399 = vsub.s32 %v396, %v398
    %v400 = vrot.slane %v384, %v399
    %v402 = vunpack.c.l.s4 1966171168
    %v403 = vunpack.c.0.s8 %v402
    %v404 = vlaneseq
    %v405 = vshrl.u32 %v404, 7
    %v406 = vsub.s32 %v403, %v405
    %v407 = vrot.slane %v391, %v406
    %v409 = vunpack.c.l.s4 1966171168
    %v410 = vunpack.c.0.s8 %v409
    %v411 = vlaneseq
    %v412 = vshrl.u32 %v411, 7
    %v413 = vsub.s32 %v410, %v412
    %v414 = vrot.slane %v392, %v413
    %v416 = vunpack.c.l.s4 1966171168
    %v417 = vunpack.c.0.s8 %v416
    %v418 = vlaneseq
    %v419 = vshrl.u32 %v418, 7
    %v420 = vsub.s32 %v417, %v419
    %v421 = vrot.slane %v393, %v420
    %v422 = vcombine.high %v400, %v400
    %v423 = vcombine.high %v407, %v407
    %v424 = vcombine.high %v414, %v414
    %v425 = vcombine.high %v421, %v421
    %v426 = vcombine.high %v142, %v142
    %v428 = vunpack.c.l.s4 1966171168
    %v429 = vunpack.c.0.s8 %v428
    %v430 = vlaneseq
    %v431 = vshrl.u32 %v430, 7
    %v432 = vsub.s32 %v429, %v431
    %v433 = vrot.slane %v142, %v432
    %v435 = vunpack.c.l.s4 1966171168
    %v436 = vunpack.c.0.s8 %v435
    %v437 = vlaneseq
    %v438 = vshrl.u32 %v437, 7
    %v439 = vsub.s32 %v436, %v438
    %v440 = vrot.slane %v426, %v439
    %v441 = vcombine.high %v433, %v433
    %v442 = vcombine.high %v440, %v440
    %v444 = vunpack.c.l.s4 1966171168
    %v445 = vunpack.c.0.s8 %v444
    %v446 = vlaneseq
    %v447 = vshrl.u32 %v446, 7
    %v448 = vsub.s32 %v445, %v447
    %v449 = vrot.slane %v433, %v448
    %v451 = vunpack.c.l.s4 1966171168
    %v452 = vunpack.c.0.s8 %v451
    %v453 = vlaneseq
    %v454 = vshrl.u32 %v453, 7
    %v455 = vsub.s32 %v452, %v454
    %v456 = vrot.slane %v440, %v455
    %v458 = vunpack.c.l.s4 1966171168
    %v459 = vunpack.c.0.s8 %v458
    %v460 = vlaneseq
    %v461 = vshrl.u32 %v460, 7
    %v462 = vsub.s32 %v459, %v461
    %v463 = vrot.slane %v441, %v462
    %v465 = vunpack.c.l.s4 1966171168
    %v466 = vunpack.c.0.s8 %v465
    %v467 = vlaneseq
    %v468 = vshrl.u32 %v467, 7
    %v469 = vsub.s32 %v466, %v468
    %v470 = vrot.slane %v442, %v469
    %v471 = vcombine.high %v449, %v449
    %v472 = vcombine.high %v456, %v456
    %v473 = vcombine.high %v463, %v463
    %v474 = vcombine.high %v470, %v470
    %v475 = vlaneseq
    %v476 = vshrl.u32 %v475, 7
    %v477 = vsub.s32 0, %v476
    %v478 = vrot.slane %v302, %v477
    %v479 = vlaneseq
    %v480 = vshrl.u32 %v479, 7
    %v481 = vsub.s32 0, %v480
    %v482 = vrot.slane %v316, %v481
    %v483 = vlaneseq
    %v484 = vshrl.u32 %v483, 7
    %v485 = vsub.s32 0, %v484
    %v486 = vrot.slane %v324, %v485
    %v487 = vlaneseq
    %v488 = vshrl.u32 %v487, 7
    %v489 = vsub.s32 0, %v488
    %v490 = vrot.slane %v326, %v489
    %v491 = vlaneseq
    %v492 = vshrl.u32 %v491, 7
    %v493 = vsub.s32 0, %v492
    %v494 = vrot.slane %v309, %v493
    %v495 = vlaneseq
    %v496 = vshrl.u32 %v495, 7
    %v497 = vsub.s32 0, %v496
    %v498 = vrot.slane %v323, %v497
    %v499 = vlaneseq
    %v500 = vshrl.u32 %v499, 7
    %v501 = vsub.s32 0, %v500
    %v502 = vrot.slane %v325, %v501
    %v503 = vlaneseq
    %v504 = vshrl.u32 %v503, 7
    %v505 = vsub.s32 0, %v504
    %v506 = vrot.slane %v327, %v505
    %v507 = vlaneseq
    %v508 = vshrl.u32 %v507, 7
    %v509 = vsub.s32 0, %v508
    %v510 = vrot.slane %v351, %v509
    %v511 = vlaneseq
    %v512 = vshrl.u32 %v511, 7
    %v513 = vsub.s32 0, %v512
    %v514 = vrot.slane %v365, %v513
    %v515 = vlaneseq
    %v516 = vshrl.u32 %v515, 7
    %v517 = vsub.s32 0, %v516
    %v518 = vrot.slane %v373, %v517
    %v519 = vlaneseq
    %v520 = vshrl.u32 %v519, 7
    %v521 = vsub.s32 0, %v520
    %v522 = vrot.slane %v375, %v521
    %v523 = vlaneseq
    %v524 = vshrl.u32 %v523, 7
    %v525 = vsub.s32 0, %v524
    %v526 = vrot.slane %v358, %v525
    %v527 = vlaneseq
    %v528 = vshrl.u32 %v527, 7
    %v529 = vsub.s32 0, %v528
    %v530 = vrot.slane %v372, %v529
    %v531 = vlaneseq
    %v532 = vshrl.u32 %v531, 7
    %v533 = vsub.s32 0, %v532
    %v534 = vrot.slane %v374, %v533
    %v535 = vlaneseq
    %v536 = vshrl.u32 %v535, 7
    %v537 = vsub.s32 0, %v536
    %v538 = vrot.slane %v376, %v537
    %v539 = vlaneseq
    %v540 = vshrl.u32 %v539, 7
    %v541 = vsub.s32 0, %v540
    %v542 = vrot.slane %v400, %v541
    %v543 = vlaneseq
    %v544 = vshrl.u32 %v543, 7
    %v545 = vsub.s32 0, %v544
    %v546 = vrot.slane %v414, %v545
    %v547 = vlaneseq
    %v548 = vshrl.u32 %v547, 7
    %v549 = vsub.s32 0, %v548
    %v550 = vrot.slane %v422, %v549
    %v551 = vlaneseq
    %v552 = vshrl.u32 %v551, 7
    %v553 = vsub.s32 0, %v552
    %v554 = vrot.slane %v424, %v553
    %v555 = vlaneseq
    %v556 = vshrl.u32 %v555, 7
    %v557 = vsub.s32 0, %v556
    %v558 = vrot.slane %v407, %v557
    %v559 = vlaneseq
    %v560 = vshrl.u32 %v559, 7
    %v561 = vsub.s32 0, %v560
    %v562 = vrot.slane %v421, %v561
    %v563 = vlaneseq
    %v564 = vshrl.u32 %v563, 7
    %v565 = vsub.s32 0, %v564
    %v566 = vrot.slane %v423, %v565
    %v567 = vlaneseq
    %v568 = vshrl.u32 %v567, 7
    %v569 = vsub.s32 0, %v568
    %v570 = vrot.slane %v425, %v569
    %v571 = vlaneseq
    %v572 = vshrl.u32 %v571, 7
    %v573 = vsub.s32 0, %v572
    %v574 = vrot.slane %v449, %v573
    %v575 = vlaneseq
    %v576 = vshrl.u32 %v575, 7
    %v577 = vsub.s32 0, %v576
    %v578 = vrot.slane %v463, %v577
    %v579 = vlaneseq
    %v580 = vshrl.u32 %v579, 7
    %v581 = vsub.s32 0, %v580
    %v582 = vrot.slane %v471, %v581
    %v583 = vlaneseq
    %v584 = vshrl.u32 %v583, 7
    %v585 = vsub.s32 0, %v584
    %v586 = vrot.slane %v473, %v585
    %v587 = vlaneseq
    %v588 = vshrl.u32 %v587, 7
    %v589 = vsub.s32 0, %v588
    %v590 = vrot.slane %v456, %v589
    %v591 = vlaneseq
    %v592 = vshrl.u32 %v591, 7
    %v593 = vsub.s32 0, %v592
    %v594 = vrot.slane %v470, %v593
    %v595 = vlaneseq
    %v596 = vshrl.u32 %v595, 7
    %v597 = vsub.s32 0, %v596
    %v598 = vrot.slane %v472, %v597
    %v599 = vlaneseq
    %v600 = vshrl.u32 %v599, 7
    %v601 = vsub.s32 0, %v600
    %v602 = vrot.slane %v474, %v601
    %v635 = vmul.f32 %v478, %v196
    %v636 = vmul.f32 %v478, %v199
    %v637 = vmul.f32 %v482, %v196
    %v638 = vmul.f32 %v482, %v199
    %v639 = vmul.f32 %v486, %v196
    %v640 = vmul.f32 %v486, %v199
    %v641 = vmul.f32 %v490, %v196
    %v642 = vmul.f32 %v490, %v199
    %v643 = vmul.f32 %v494, %v196
    %v644 = vmul.f32 %v494, %v199
    %v645 = vmul.f32 %v498, %v196
    %v646 = vmul.f32 %v498, %v199
    %v647 = vmul.f32 %v502, %v196
    %v648 = vmul.f32 %v502, %v199
    %v649 = vmul.f32 %v506, %v196
    %v650 = vmul.f32 %v506, %v199
    %v651 = vmul.f32 %v510, %v196
    %v652 = vmul.f32 %v510, %v199
    %v653 = vmul.f32 %v514, %v196
    %v654 = vmul.f32 %v514, %v199
    %v655 = vmul.f32 %v518, %v196
    %v656 = vmul.f32 %v518, %v199
    %v657 = vmul.f32 %v522, %v196
    %v658 = vmul.f32 %v522, %v199
    %v659 = vmul.f32 %v526, %v196
    %v660 = vmul.f32 %v526, %v199
    %v661 = vmul.f32 %v530, %v196
    %v662 = vmul.f32 %v530, %v199
    %v663 = vmul.f32 %v534, %v196
    %v664 = vmul.f32 %v534, %v199
    %v665 = vmul.f32 %v538, %v196
    %v666 = vmul.f32 %v538, %v199
    %v667 = vmul.f32 %v542, %v204
    %v668 = vmul.f32 %v542, %v207
    %v669 = vmul.f32 %v546, %v204
    %v670 = vmul.f32 %v546, %v207
    %v671 = vmul.f32 %v550, %v204
    %v672 = vmul.f32 %v550, %v207
    %v673 = vmul.f32 %v554, %v204
    %v674 = vmul.f32 %v554, %v207
    %v675 = vmul.f32 %v558, %v204
    %v676 = vmul.f32 %v558, %v207
    %v677 = vmul.f32 %v562, %v204
    %v678 = vmul.f32 %v562, %v207
    %v679 = vmul.f32 %v566, %v204
    %v680 = vmul.f32 %v566, %v207
    %v681 = vmul.f32 %v570, %v204
    %v682 = vmul.f32 %v570, %v207
    %v683 = vmul.f32 %v574, %v204
    %v684 = vmul.f32 %v574, %v207
    %v685 = vmul.f32 %v578, %v204
    %v686 = vmul.f32 %v578, %v207
    %v687 = vmul.f32 %v582, %v204
    %v688 = vmul.f32 %v582, %v207
    %v689 = vmul.f32 %v586, %v204
    %v690 = vmul.f32 %v586, %v207
    %v691 = vmul.f32 %v590, %v204
    %v692 = vmul.f32 %v590, %v207
    %v693 = vmul.f32 %v594, %v204
    %v694 = vmul.f32 %v594, %v207
    %v695 = vmul.f32 %v598, %v204
    %v696 = vmul.f32 %v598, %v207
    %v697 = vmul.f32 %v602, %v204
    %v698 = vmul.f32 %v602, %v207
    %v699 = vld [vmem:[%s4] sm:$0xff]
    %v700 = vld [vmem:[%s4 + $0x8] sm:$0xff]
    %v701 = vld [vmem:[%s4 + $0x10] sm:$0xff]
    %v702 = vld [vmem:[%s4 + $0x18] sm:$0xff]
    %v704 = vsel %vm89, %v635, 0
    %v707 = vsel %vm89, %v636, 0
    %v710 = vsel %vm89, %v637, 0
    %v713 = vsel %vm89, %v638, 0
    %v716 = vsel %vm89, %v639, 0
    %v719 = vsel %vm89, %v640, 0
    %v722 = vsel %vm89, %v641, 0
    %v725 = vsel %vm89, %v642, 0
    %v728 = vsel %vm89, %v643, 0
    %v731 = vsel %vm89, %v644, 0
    %v734 = vsel %vm89, %v645, 0
    %v737 = vsel %vm89, %v646, 0
    %v740 = vsel %vm89, %v647, 0
    %v743 = vsel %vm89, %v648, 0
    %v746 = vsel %vm89, %v649, 0
    %v749 = vsel %vm89, %v650, 0
    %v752 = vsel %vm89, %v651, 0
    %v755 = vsel %vm89, %v652, 0
    %v758 = vsel %vm89, %v653, 0
    %v761 = vsel %vm89, %v654, 0
    %v764 = vsel %vm89, %v655, 0
    %v767 = vsel %vm89, %v656, 0
    %v770 = vsel %vm89, %v657, 0
    %v773 = vsel %vm89, %v658, 0
    %v776 = vsel %vm89, %v659, 0
    %v779 = vsel %vm89, %v660, 0
    %v782 = vsel %vm89, %v661, 0
    %v785 = vsel %vm89, %v662, 0
    %v788 = vsel %vm89, %v663, 0
    %v791 = vsel %vm89, %v664, 0
    %v794 = vsel %vm89, %v665, 0
    %v797 = vsel %vm89, %v666, 0
    %v800 = vsel %vm89, %v667, 0
    %v803 = vsel %vm89, %v668, 0
    %v806 = vsel %vm89, %v669, 0
    %v809 = vsel %vm89, %v670, 0
    %v812 = vsel %vm89, %v671, 0
    %v815 = vsel %vm89, %v672, 0
    %v818 = vsel %vm89, %v673, 0
    %v821 = vsel %vm89, %v674, 0
    %v824 = vsel %vm89, %v675, 0
    %v827 = vsel %vm89, %v676, 0
    %v830 = vsel %vm89, %v677, 0
    %v833 = vsel %vm89, %v678, 0
    %v836 = vsel %vm89, %v679, 0
    %v839 = vsel %vm89, %v680, 0
    %v842 = vsel %vm89, %v681, 0
    %v845 = vsel %vm89, %v682, 0
    %v848 = vsel %vm89, %v683, 0
    %v851 = vsel %vm89, %v684, 0
    %v854 = vsel %vm89, %v685, 0
    %v857 = vsel %vm89, %v686, 0
    %v860 = vsel %vm89, %v687, 0
    %v863 = vsel %vm89, %v688, 0
    %v866 = vsel %vm89, %v689, 0
    %v869 = vsel %vm89, %v690, 0
    %v872 = vsel %vm89, %v691, 0
    %v875 = vsel %vm89, %v692, 0
    %v878 = vsel %vm89, %v693, 0
    %v881 = vsel %vm89, %v694, 0
    %v884 = vsel %vm89, %v695, 0
    %v887 = vsel %vm89, %v696, 0
    %v890 = vsel %vm89, %v697, 0
    %v893 = vsel %vm89, %v698, 0
    %895 = vmatprep.subr.mxu0 0.0
    %896 = vmatpush1.msra.mxu0 %v699
    %897 = vmatprep.subr.mxu0 0.0
    %898 = vmatpush1.msra.mxu0 %v700
    %899 = vmatprep.subr.mxu0 0.0
    %900 = vmatpush1.msra.mxu0 %v701
    %901 = vmatprep.subr.mxu0 0.0
    %902 = vmatpush1.msra.mxu0 %v702
    %903 = vmatprep.subr.mxu0 0.0
    %904 = vmatpush1.msra.mxu0 0.0
    %905 = vmatprep.subr.mxu0 0.0
    %906 = vmatpush1.msra.mxu0 0.0
    %907 = vmatprep.subr.mxu0 0.0
    %908 = vmatpush1.msra.mxu0 0.0
    %909 = vmatprep.subr.mxu0 0.0
    %910 = vmatpush1.msra.mxu0 0.0
    %911 = vmatprep.subr.mxu0 0.0
    %912 = vmatpush1.msra.mxu0 0.0
    %913 = vmatprep.subr.mxu0 0.0
    %914 = vmatpush1.msra.mxu0 0.0
    %915 = vmatprep.subr.mxu0 0.0
    %916 = vmatpush1.msra.mxu0 0.0
    %917 = vmatprep.subr.mxu0 0.0
    %918 = vmatpush1.msra.mxu0 0.0
    %919 = vmatprep.subr.mxu0 0.0
    %920 = vmatpush1.msra.mxu0 0.0
    %921 = vmatprep.subr.mxu0 0.0
    %922 = vmatpush1.msra.mxu0 0.0
    %923 = vmatprep.subr.mxu0 0.0
    %924 = vmatpush1.msra.mxu0 0.0
    %925 = vmatprep.subr.mxu0 0.0
    %926 = vmatpush1.msra.mxu0 0.0
    %927 = vmatprep.subr.mxu0 0.0
    %928 = vmatpush1.msra.mxu0 0.0
    %929 = vmatprep.subr.mxu0 0.0
    %930 = vmatpush1.msra.mxu0 0.0
    %931 = vmatprep.subr.mxu0 0.0
    %932 = vmatpush1.msra.mxu0 0.0
    %933 = vmatprep.subr.mxu0 0.0
    %934 = vmatpush1.msra.mxu0 0.0
    %935 = vmatprep.subr.mxu0 0.0
    %936 = vmatpush1.msra.mxu0 0.0
    %937 = vmatprep.subr.mxu0 0.0
    %938 = vmatpush1.msra.mxu0 0.0
    %939 = vmatprep.subr.mxu0 0.0
    %940 = vmatpush1.msra.mxu0 0.0
    %941 = vmatprep.subr.mxu0 0.0
    %942 = vmatpush1.msra.mxu0 0.0
    %943 = vmatprep.subr.mxu0 0.0
    %944 = vmatpush1.msra.mxu0 0.0
    %945 = vmatprep.subr.mxu0 0.0
    %946 = vmatpush1.msra.mxu0 0.0
    %947 = vmatprep.subr.mxu0 0.0
    %948 = vmatpush1.msra.mxu0 0.0
    %949 = vmatprep.subr.mxu0 0.0
    %950 = vmatpush1.msra.mxu0 0.0
    %951 = vmatprep.subr.mxu0 0.0
    %952 = vmatpush1.msra.mxu0 0.0
    %953 = vmatprep.subr.mxu0 0.0
    %954 = vmatpush1.msra.mxu0 0.0
    %955 = vmatprep.subr.mxu0 0.0
    %956 = vmatpush1.msra.mxu0 0.0
    %957 = vmatprep.subr.mxu0 0.0
    %958 = vmatpush1.msra.mxu0 0.0
    %959 = vmatprep.mubr.f32.mxu0 0.0
    %960 = vmatmul.mubr.f32.gmra.mrb[0].mxu0 %v704
    %v961 = vpop.f32.mrb[0].mxu0
    %v962 = vadd.f32 0.0, %v961
    %v963 = vpop.f32.mrb[0].mxu0
    %964 = vmatprep.mubr.f32.mxu0 0.0
    %965 = vmatmul.mubr.f32.gmra.mrb[0].mxu0 %v707
    %v966 = vpop.f32.mrb[0].mxu0
    %v967 = vadd.f32 0.0, %v966
    %v968 = vpop.f32.mrb[0].mxu0
    %969 = vmatprep.mubr.f32.mxu0 0.0
    %970 = vmatmul.mubr.f32.gmra.mrb[0].mxu0 %v710
    %v971 = vpop.f32.mrb[0].mxu0
    %v972 = vadd.f32 0.0, %v971
    %v973 = vpop.f32.mrb[0].mxu0
    %974 = vmatprep.mubr.f32.mxu0 0.0
    %975 = vmatmul.mubr.f32.gmra.mrb[0].mxu0 %v713
    %v976 = vpop.f32.mrb[0].mxu0
    %v977 = vadd.f32 0.0, %v976
    %v978 = vpop.f32.mrb[0].mxu0
    %979 = vmatprep.mubr.f32.mxu0 0.0
    %980 = vmatmul.mubr.f32.gmra.mrb[0].mxu0 %v716
    %v981 = vpop.f32.mrb[0].mxu0
    %v982 = vadd.f32 0.0, %v981
    %v983 = vpop.f32.mrb[0].mxu0
    %984 = vmatprep.mubr.f32.mxu0 0.0
    %985 = vmatmul.mubr.f32.gmra.mrb[0].mxu0 %v719
    %v986 = vpop.f32.mrb[0].mxu0
    %v987 = vadd.f32 0.0, %v986
    %v988 = vpop.f32.mrb[0].mxu0
    %989 = vmatprep.mubr.f32.mxu0 0.0
    %990 = vmatmul.mubr.f32.gmra.mrb[0].mxu0 %v722
    %v991 = vpop.f32.mrb[0].mxu0
    %v992 = vadd.f32 0.0, %v991
    %v993 = vpop.f32.mrb[0].mxu0
    %994 = vmatprep.mubr.f32.mxu0 0.0
    %995 = vmatmul.mubr.f32.gmra.mrb[0].mxu0 %v725
    %v996 = vpop.f32.mrb[0].mxu0
    %v997 = vadd.f32 0.0, %v996
    %v998 = vpop.f32.mrb[0].mxu0
    %999 = vmatprep.mubr.f32.mxu0 0.0
    %1000 = vmatmul.mubr.f32.gmra.mrb[0].mxu0 %v728
    %v1001 = vpop.f32.mrb[0].mxu0
    %v1002 = vadd.f32 0.0, %v1001
    %v1003 = vpop.f32.mrb[0].mxu0
    %1004 = vmatprep.mubr.f32.mxu0 0.0
    %1005 = vmatmul.mubr.f32.gmra.mrb[0].mxu0 %v731
    %v1006 = vpop.f32.mrb[0].mxu0
    %v1007 = vadd.f32 0.0, %v1006
    %v1008 = vpop.f32.mrb[0].mxu0
    %1009 = vmatprep.mubr.f32.mxu0 0.0
    %1010 = vmatmul.mubr.f32.gmra.mrb[0].mxu0 %v734
    %v1011 = vpop.f32.mrb[0].mxu0
    %v1012 = vadd.f32 0.0, %v1011
    %v1013 = vpop.f32.mrb[0].mxu0
    %1014 = vmatprep.mubr.f32.mxu0 0.0
    %1015 = vmatmul.mubr.f32.gmra.mrb[0].mxu0 %v737
    %v1016 = vpop.f32.mrb[0].mxu0
    %v1017 = vadd.f32 0.0, %v1016
    %v1018 = vpop.f32.mrb[0].mxu0
    %1019 = vmatprep.mubr.f32.mxu0 0.0
    %1020 = vmatmul.mubr.f32.gmra.mrb[0].mxu0 %v740
    %v1021 = vpop.f32.mrb[0].mxu0
    %v1022 = vadd.f32 0.0, %v1021
    %v1023 = vpop.f32.mrb[0].mxu0
    %1024 = vmatprep.mubr.f32.mxu0 0.0
    %1025 = vmatmul.mubr.f32.gmra.mrb[0].mxu0 %v743
    %v1026 = vpop.f32.mrb[0].mxu0
    %v1027 = vadd.f32 0.0, %v1026
    %v1028 = vpop.f32.mrb[0].mxu0
    %1029 = vmatprep.mubr.f32.mxu0 0.0
    %1030 = vmatmul.mubr.f32.gmra.mrb[0].mxu0 %v746
    %v1031 = vpop.f32.mrb[0].mxu0
    %v1032 = vadd.f32 0.0, %v1031
    %v1033 = vpop.f32.mrb[0].mxu0
    %1034 = vmatprep.mubr.f32.mxu0 0.0
    %1035 = vmatmul.mubr.f32.gmra.mrb[0].mxu0 %v749
    %v1036 = vpop.f32.mrb[0].mxu0
    %v1037 = vadd.f32 0.0, %v1036
    %v1038 = vpop.f32.mrb[0].mxu0
    %1039 = vmatprep.mubr.f32.mxu0 0.0
    %1040 = vmatmul.mubr.f32.gmra.mrb[0].mxu0 %v752
    %v1041 = vpop.f32.mrb[0].mxu0
    %v1042 = vadd.f32 0.0, %v1041
    %v1043 = vpop.f32.mrb[0].mxu0
    %1044 = vmatprep.mubr.f32.mxu0 0.0
    %1045 = vmatmul.mubr.f32.gmra.mrb[0].mxu0 %v755
    %v1046 = vpop.f32.mrb[0].mxu0
    %v1047 = vadd.f32 0.0, %v1046
    %v1048 = vpop.f32.mrb[0].mxu0
    %1049 = vmatprep.mubr.f32.mxu0 0.0
    %1050 = vmatmul.mubr.f32.gmra.mrb[0].mxu0 %v758
    %v1051 = vpop.f32.mrb[0].mxu0
    %v1052 = vadd.f32 0.0, %v1051
    %v1053 = vpop.f32.mrb[0].mxu0
    %1054 = vmatprep.mubr.f32.mxu0 0.0
    %1055 = vmatmul.mubr.f32.gmra.mrb[0].mxu0 %v761
    %v1056 = vpop.f32.mrb[0].mxu0
    %v1057 = vadd.f32 0.0, %v1056
    %v1058 = vpop.f32.mrb[0].mxu0
    %1059 = vmatprep.mubr.f32.mxu0 0.0
    %1060 = vmatmul.mubr.f32.gmra.mrb[0].mxu0 %v764
    %v1061 = vpop.f32.mrb[0].mxu0
    %v1062 = vadd.f32 0.0, %v1061
    %v1063 = vpop.f32.mrb[0].mxu0
    %1064 = vmatprep.mubr.f32.mxu0 0.0
    %1065 = vmatmul.mubr.f32.gmra.mrb[0].mxu0 %v767
    %v1066 = vpop.f32.mrb[0].mxu0
    %v1067 = vadd.f32 0.0, %v1066
    %v1068 = vpop.f32.mrb[0].mxu0
    %1069 = vmatprep.mubr.f32.mxu0 0.0
    %1070 = vmatmul.mubr.f32.gmra.mrb[0].mxu0 %v770
    %v1071 = vpop.f32.mrb[0].mxu0
    %v1072 = vadd.f32 0.0, %v1071
    %v1073 = vpop.f32.mrb[0].mxu0
    %1074 = vmatprep.mubr.f32.mxu0 0.0
    %1075 = vmatmul.mubr.f32.gmra.mrb[0].mxu0 %v773
    %v1076 = vpop.f32.mrb[0].mxu0
    %v1077 = vadd.f32 0.0, %v1076
    %v1078 = vpop.f32.mrb[0].mxu0
    %1079 = vmatprep.mubr.f32.mxu0 0.0
    %1080 = vmatmul.mubr.f32.gmra.mrb[0].mxu0 %v776
    %v1081 = vpop.f32.mrb[0].mxu0
    %v1082 = vadd.f32 0.0, %v1081
    %v1083 = vpop.f32.mrb[0].mxu0
    %1084 = vmatprep.mubr.f32.mxu0 0.0
    %1085 = vmatmul.mubr.f32.gmra.mrb[0].mxu0 %v779
    %v1086 = vpop.f32.mrb[0].mxu0
    %v1087 = vadd.f32 0.0, %v1086
    %v1088 = vpop.f32.mrb[0].mxu0
    %1089 = vmatprep.mubr.f32.mxu0 0.0
    %1090 = vmatmul.mubr.f32.gmra.mrb[0].mxu0 %v782
    %v1091 = vpop.f32.mrb[0].mxu0
    %v1092 = vadd.f32 0.0, %v1091
    %v1093 = vpop.f32.mrb[0].mxu0
    %1094 = vmatprep.mubr.f32.mxu0 0.0
    %1095 = vmatmul.mubr.f32.gmra.mrb[0].mxu0 %v785
    %v1096 = vpop.f32.mrb[0].mxu0
    %v1097 = vadd.f32 0.0, %v1096
    %v1098 = vpop.f32.mrb[0].mxu0
    %1099 = vmatprep.mubr.f32.mxu0 0.0
    %1100 = vmatmul.mubr.f32.gmra.mrb[0].mxu0 %v788
    %v1101 = vpop.f32.mrb[0].mxu0
    %v1102 = vadd.f32 0.0, %v1101
    %v1103 = vpop.f32.mrb[0].mxu0
    %1104 = vmatprep.mubr.f32.mxu0 0.0
    %1105 = vmatmul.mubr.f32.gmra.mrb[0].mxu0 %v791
    %v1106 = vpop.f32.mrb[0].mxu0
    %v1107 = vadd.f32 0.0, %v1106
    %v1108 = vpop.f32.mrb[0].mxu0
    %1109 = vmatprep.mubr.f32.mxu0 0.0
    %1110 = vmatmul.mubr.f32.gmra.mrb[0].mxu0 %v794
    %v1111 = vpop.f32.mrb[0].mxu0
    %v1112 = vadd.f32 0.0, %v1111
    %v1113 = vpop.f32.mrb[0].mxu0
    %1114 = vmatprep.mubr.f32.mxu0 0.0
    %1115 = vmatmul.mubr.f32.gmra.mrb[0].mxu0 %v797
    %v1116 = vpop.f32.mrb[0].mxu0
    %v1117 = vadd.f32 0.0, %v1116
    %v1118 = vpop.f32.mrb[0].mxu0
    %1119 = vmatprep.mubr.f32.mxu0 0.0
    %1120 = vmatmul.mubr.f32.gmra.mrb[0].mxu0 %v800
    %v1121 = vpop.f32.mrb[0].mxu0
    %v1122 = vadd.f32 0.0, %v1121
    %v1123 = vpop.f32.mrb[0].mxu0
    %1124 = vmatprep.mubr.f32.mxu0 0.0
    %1125 = vmatmul.mubr.f32.gmra.mrb[0].mxu0 %v803
    %v1126 = vpop.f32.mrb[0].mxu0
    %v1127 = vadd.f32 0.0, %v1126
    %v1128 = vpop.f32.mrb[0].mxu0
    %1129 = vmatprep.mubr.f32.mxu0 0.0
    %1130 = vmatmul.mubr.f32.gmra.mrb[0].mxu0 %v806
    %v1131 = vpop.f32.mrb[0].mxu0
    %v1132 = vadd.f32 0.0, %v1131
    %v1133 = vpop.f32.mrb[0].mxu0
    %1134 = vmatprep.mubr.f32.mxu0 0.0
    %1135 = vmatmul.mubr.f32.gmra.mrb[0].mxu0 %v809
    %v1136 = vpop.f32.mrb[0].mxu0
    %v1137 = vadd.f32 0.0, %v1136
    %v1138 = vpop.f32.mrb[0].mxu0
    %1139 = vmatprep.mubr.f32.mxu0 0.0
    %1140 = vmatmul.mubr.f32.gmra.mrb[0].mxu0 %v812
    %v1141 = vpop.f32.mrb[0].mxu0
    %v1142 = vadd.f32 0.0, %v1141
    %v1143 = vpop.f32.mrb[0].mxu0
    %1144 = vmatprep.mubr.f32.mxu0 0.0
    %1145 = vmatmul.mubr.f32.gmra.mrb[0].mxu0 %v815
    %v1146 = vpop.f32.mrb[0].mxu0
    %v1147 = vadd.f32 0.0, %v1146
    %v1148 = vpop.f32.mrb[0].mxu0
    %1149 = vmatprep.mubr.f32.mxu0 0.0
    %1150 = vmatmul.mubr.f32.gmra.mrb[0].mxu0 %v818
    %v1151 = vpop.f32.mrb[0].mxu0
    %v1152 = vadd.f32 0.0, %v1151
    %v1153 = vpop.f32.mrb[0].mxu0
    %1154 = vmatprep.mubr.f32.mxu0 0.0
    %1155 = vmatmul.mubr.f32.gmra.mrb[0].mxu0 %v821
    %v1156 = vpop.f32.mrb[0].mxu0
    %v1157 = vadd.f32 0.0, %v1156
    %v1158 = vpop.f32.mrb[0].mxu0
    %1159 = vmatprep.mubr.f32.mxu0 0.0
    %1160 = vmatmul.mubr.f32.gmra.mrb[0].mxu0 %v824
    %v1161 = vpop.f32.mrb[0].mxu0
    %v1162 = vadd.f32 0.0, %v1161
    %v1163 = vpop.f32.mrb[0].mxu0
    %1164 = vmatprep.mubr.f32.mxu0 0.0
    %1165 = vmatmul.mubr.f32.gmra.mrb[0].mxu0 %v827
    %v1166 = vpop.f32.mrb[0].mxu0
    %v1167 = vadd.f32 0.0, %v1166
    %v1168 = vpop.f32.mrb[0].mxu0
    %1169 = vmatprep.mubr.f32.mxu0 0.0
    %1170 = vmatmul.mubr.f32.gmra.mrb[0].mxu0 %v830
    %v1171 = vpop.f32.mrb[0].mxu0
    %v1172 = vadd.f32 0.0, %v1171
    %v1173 = vpop.f32.mrb[0].mxu0
    %1174 = vmatprep.mubr.f32.mxu0 0.0
    %1175 = vmatmul.mubr.f32.gmra.mrb[0].mxu0 %v833
    %v1176 = vpop.f32.mrb[0].mxu0
    %v1177 = vadd.f32 0.0, %v1176
    %v1178 = vpop.f32.mrb[0].mxu0
    %1179 = vmatprep.mubr.f32.mxu0 0.0
    %1180 = vmatmul.mubr.f32.gmra.mrb[0].mxu0 %v836
    %v1181 = vpop.f32.mrb[0].mxu0
    %v1182 = vadd.f32 0.0, %v1181
    %v1183 = vpop.f32.mrb[0].mxu0
    %1184 = vmatprep.mubr.f32.mxu0 0.0
    %1185 = vmatmul.mubr.f32.gmra.mrb[0].mxu0 %v839
    %v1186 = vpop.f32.mrb[0].mxu0
    %v1187 = vadd.f32 0.0, %v1186
    %v1188 = vpop.f32.mrb[0].mxu0
    %1189 = vmatprep.mubr.f32.mxu0 0.0
    %1190 = vmatmul.mubr.f32.gmra.mrb[0].mxu0 %v842
    %v1191 = vpop.f32.mrb[0].mxu0
    %v1192 = vadd.f32 0.0, %v1191
    %v1193 = vpop.f32.mrb[0].mxu0
    %1194 = vmatprep.mubr.f32.mxu0 0.0
    %1195 = vmatmul.mubr.f32.gmra.mrb[0].mxu0 %v845
    %v1196 = vpop.f32.mrb[0].mxu0
    %v1197 = vadd.f32 0.0, %v1196
    %v1198 = vpop.f32.mrb[0].mxu0
    %1199 = vmatprep.mubr.f32.mxu0 0.0
    %1200 = vmatmul.mubr.f32.gmra.mrb[0].mxu0 %v848
    %v1201 = vpop.f32.mrb[0].mxu0
    %v1202 = vadd.f32 0.0, %v1201
    %v1203 = vpop.f32.mrb[0].mxu0
    %1204 = vmatprep.mubr.f32.mxu0 0.0
    %1205 = vmatmul.mubr.f32.gmra.mrb[0].mxu0 %v851
    %v1206 = vpop.f32.mrb[0].mxu0
    %v1207 = vadd.f32 0.0, %v1206
    %v1208 = vpop.f32.mrb[0].mxu0
    %1209 = vmatprep.mubr.f32.mxu0 0.0
    %1210 = vmatmul.mubr.f32.gmra.mrb[0].mxu0 %v854
    %v1211 = vpop.f32.mrb[0].mxu0
    %v1212 = vadd.f32 0.0, %v1211
    %v1213 = vpop.f32.mrb[0].mxu0
    %1214 = vmatprep.mubr.f32.mxu0 0.0
    %1215 = vmatmul.mubr.f32.gmra.mrb[0].mxu0 %v857
    %v1216 = vpop.f32.mrb[0].mxu0
    %v1217 = vadd.f32 0.0, %v1216
    %v1218 = vpop.f32.mrb[0].mxu0
    %1219 = vmatprep.mubr.f32.mxu0 0.0
    %1220 = vmatmul.mubr.f32.gmra.mrb[0].mxu0 %v860
    %v1221 = vpop.f32.mrb[0].mxu0
    %v1222 = vadd.f32 0.0, %v1221
    %v1223 = vpop.f32.mrb[0].mxu0
    %1224 = vmatprep.mubr.f32.mxu0 0.0
    %1225 = vmatmul.mubr.f32.gmra.mrb[0].mxu0 %v863
    %v1226 = vpop.f32.mrb[0].mxu0
    %v1227 = vadd.f32 0.0, %v1226
    %v1228 = vpop.f32.mrb[0].mxu0
    %1229 = vmatprep.mubr.f32.mxu0 0.0
    %1230 = vmatmul.mubr.f32.gmra.mrb[0].mxu0 %v866
    %v1231 = vpop.f32.mrb[0].mxu0
    %v1232 = vadd.f32 0.0, %v1231
    %v1233 = vpop.f32.mrb[0].mxu0
    %1234 = vmatprep.mubr.f32.mxu0 0.0
    %1235 = vmatmul.mubr.f32.gmra.mrb[0].mxu0 %v869
    %v1236 = vpop.f32.mrb[0].mxu0
    %v1237 = vadd.f32 0.0, %v1236
    %v1238 = vpop.f32.mrb[0].mxu0
    %1239 = vmatprep.mubr.f32.mxu0 0.0
    %1240 = vmatmul.mubr.f32.gmra.mrb[0].mxu0 %v872
    %v1241 = vpop.f32.mrb[0].mxu0
    %v1242 = vadd.f32 0.0, %v1241
    %v1243 = vpop.f32.mrb[0].mxu0
    %1244 = vmatprep.mubr.f32.mxu0 0.0
    %1245 = vmatmul.mubr.f32.gmra.mrb[0].mxu0 %v875
    %v1246 = vpop.f32.mrb[0].mxu0
    %v1247 = vadd.f32 0.0, %v1246
    %v1248 = vpop.f32.mrb[0].mxu0
    %1249 = vmatprep.mubr.f32.mxu0 0.0
    %1250 = vmatmul.mubr.f32.gmra.mrb[0].mxu0 %v878
    %v1251 = vpop.f32.mrb[0].mxu0
    %v1252 = vadd.f32 0.0, %v1251
    %v1253 = vpop.f32.mrb[0].mxu0
    %1254 = vmatprep.mubr.f32.mxu0 0.0
    %1255 = vmatmul.mubr.f32.gmra.mrb[0].mxu0 %v881
    %v1256 = vpop.f32.mrb[0].mxu0
    %v1257 = vadd.f32 0.0, %v1256
    %v1258 = vpop.f32.mrb[0].mxu0
    %1259 = vmatprep.mubr.f32.mxu0 0.0
    %1260 = vmatmul.mubr.f32.gmra.mrb[0].mxu0 %v884
    %v1261 = vpop.f32.mrb[0].mxu0
    %v1262 = vadd.f32 0.0, %v1261
    %v1263 = vpop.f32.mrb[0].mxu0
    %1264 = vmatprep.mubr.f32.mxu0 0.0
    %1265 = vmatmul.mubr.f32.gmra.mrb[0].mxu0 %v887
    %v1266 = vpop.f32.mrb[0].mxu0
    %v1267 = vadd.f32 0.0, %v1266
    %v1268 = vpop.f32.mrb[0].mxu0
    %1269 = vmatprep.mubr.f32.mxu0 0.0
    %1270 = vmatmul.mubr.f32.gmra.mrb[0].mxu0 %v890
    %v1271 = vpop.f32.mrb[0].mxu0
    %v1272 = vadd.f32 0.0, %v1271
    %v1273 = vpop.f32.mrb[0].mxu0
    %1274 = vmatprep.mubr.f32.mxu0 0.0
    %1275 = vmatmul.mubr.f32.gmra.mrb[0].mxu0 %v893
    %v1276 = vpop.f32.mrb[0].mxu0
    %v1277 = vadd.f32 0.0, %v1276
    %v1278 = vpop.f32.mrb[0].mxu0
    %1279 = vdwg.mxu0
    %vm1280 = vcmask 64512
    %v1281 = vsel %vm1280, %v962, -inf
    %v1282 = vsel %vm1280, %v967, -inf
    %v1283 = vmax.f32 %v1281, %v1282
    %v1284 = vrot.slane %v1283, 4
    %v1285 = vmax.f32 %v1283, %v1284
    %v1286 = vrot.slane %v1285, 2
    %v1287 = vmax.f32 %v1285, %v1286
    %v1288 = vrot.slane %v1287, 1
    %v1289 = vmax.f32 %v1287, %v1288
    %v1290 = vsel %vm1280, %v972, -inf
    %v1291 = vsel %vm1280, %v977, -inf
    %v1292 = vmax.f32 %v1290, %v1291
    %v1293 = vrot.slane %v1292, 4
    %v1294 = vmax.f32 %v1292, %v1293
    %v1295 = vrot.slane %v1294, 2
    %v1296 = vmax.f32 %v1294, %v1295
    %v1297 = vrot.slane %v1296, 1
    %v1298 = vmax.f32 %v1296, %v1297
    %v1299 = vsel %vm1280, %v982, -inf
    %v1300 = vsel %vm1280, %v987, -inf
    %v1301 = vmax.f32 %v1299, %v1300
    %v1302 = vrot.slane %v1301, 4
    %v1303 = vmax.f32 %v1301, %v1302
    %v1304 = vrot.slane %v1303, 2
    %v1305 = vmax.f32 %v1303, %v1304
    %v1306 = vrot.slane %v1305, 1
    %v1307 = vmax.f32 %v1305, %v1306
    %v1308 = vsel %vm1280, %v992, -inf
    %v1309 = vsel %vm1280, %v997, -inf
    %v1310 = vmax.f32 %v1308, %v1309
    %v1311 = vrot.slane %v1310, 4
    %v1312 = vmax.f32 %v1310, %v1311
    %v1313 = vrot.slane %v1312, 2
    %v1314 = vmax.f32 %v1312, %v1313
    %v1315 = vrot.slane %v1314, 1
    %v1316 = vmax.f32 %v1314, %v1315
    %v1317 = vsel %vm1280, %v1002, -inf
    %v1318 = vsel %vm1280, %v1007, -inf
    %v1319 = vmax.f32 %v1317, %v1318
    %v1320 = vrot.slane %v1319, 4
    %v1321 = vmax.f32 %v1319, %v1320
    %v1322 = vrot.slane %v1321, 2
    %v1323 = vmax.f32 %v1321, %v1322
    %v1324 = vrot.slane %v1323, 1
    %v1325 = vmax.f32 %v1323, %v1324
    %v1326 = vsel %vm1280, %v1012, -inf
    %v1327 = vsel %vm1280, %v1017, -inf
    %v1328 = vmax.f32 %v1326, %v1327
    %v1329 = vrot.slane %v1328, 4
    %v1330 = vmax.f32 %v1328, %v1329
    %v1331 = vrot.slane %v1330, 2
    %v1332 = vmax.f32 %v1330, %v1331
    %v1333 = vrot.slane %v1332, 1
    %v1334 = vmax.f32 %v1332, %v1333
    %v1335 = vsel %vm1280, %v1022, -inf
    %v1336 = vsel %vm1280, %v1027, -inf
    %v1337 = vmax.f32 %v1335, %v1336
    %v1338 = vrot.slane %v1337, 4
    %v1339 = vmax.f32 %v1337, %v1338
    %v1340 = vrot.slane %v1339, 2
    %v1341 = vmax.f32 %v1339, %v1340
    %v1342 = vrot.slane %v1341, 1
    %v1343 = vmax.f32 %v1341, %v1342
    %v1344 = vsel %vm1280, %v1032, -inf
    %v1345 = vsel %vm1280, %v1037, -inf
    %v1346 = vmax.f32 %v1344, %v1345
    %v1347 = vrot.slane %v1346, 4
    %v1348 = vmax.f32 %v1346, %v1347
    %v1349 = vrot.slane %v1348, 2
    %v1350 = vmax.f32 %v1348, %v1349
    %v1351 = vrot.slane %v1350, 1
    %v1352 = vmax.f32 %v1350, %v1351
    %v1353 = vsel %vm1280, %v1042, -inf
    %v1354 = vsel %vm1280, %v1047, -inf
    %v1355 = vmax.f32 %v1353, %v1354
    %v1356 = vrot.slane %v1355, 4
    %v1357 = vmax.f32 %v1355, %v1356
    %v1358 = vrot.slane %v1357, 2
    %v1359 = vmax.f32 %v1357, %v1358
    %v1360 = vrot.slane %v1359, 1
    %v1361 = vmax.f32 %v1359, %v1360
    %v1362 = vsel %vm1280, %v1052, -inf
    %v1363 = vsel %vm1280, %v1057, -inf
    %v1364 = vmax.f32 %v1362, %v1363
    %v1365 = vrot.slane %v1364, 4
    %v1366 = vmax.f32 %v1364, %v1365
    %v1367 = vrot.slane %v1366, 2
    %v1368 = vmax.f32 %v1366, %v1367
    %v1369 = vrot.slane %v1368, 1
    %v1370 = vmax.f32 %v1368, %v1369
    %v1371 = vsel %vm1280, %v1062, -inf
    %v1372 = vsel %vm1280, %v1067, -inf
    %v1373 = vmax.f32 %v1371, %v1372
    %v1374 = vrot.slane %v1373, 4
    %v1375 = vmax.f32 %v1373, %v1374
    %v1376 = vrot.slane %v1375, 2
    %v1377 = vmax.f32 %v1375, %v1376
    %v1378 = vrot.slane %v1377, 1
    %v1379 = vmax.f32 %v1377, %v1378
    %v1380 = vsel %vm1280, %v1072, -inf
    %v1381 = vsel %vm1280, %v1077, -inf
    %v1382 = vmax.f32 %v1380, %v1381
    %v1383 = vrot.slane %v1382, 4
    %v1384 = vmax.f32 %v1382, %v1383
    %v1385 = vrot.slane %v1384, 2
    %v1386 = vmax.f32 %v1384, %v1385
    %v1387 = vrot.slane %v1386, 1
    %v1388 = vmax.f32 %v1386, %v1387
    %v1389 = vsel %vm1280, %v1082, -inf
    %v1390 = vsel %vm1280, %v1087, -inf
    %v1391 = vmax.f32 %v1389, %v1390
    %v1392 = vrot.slane %v1391, 4
    %v1393 = vmax.f32 %v1391, %v1392
    %v1394 = vrot.slane %v1393, 2
    %v1395 = vmax.f32 %v1393, %v1394
    %v1396 = vrot.slane %v1395, 1
    %v1397 = vmax.f32 %v1395, %v1396
    %v1398 = vsel %vm1280, %v1092, -inf
    %v1399 = vsel %vm1280, %v1097, -inf
    %v1400 = vmax.f32 %v1398, %v1399
    %v1401 = vrot.slane %v1400, 4
    %v1402 = vmax.f32 %v1400, %v1401
    %v1403 = vrot.slane %v1402, 2
    %v1404 = vmax.f32 %v1402, %v1403
    %v1405 = vrot.slane %v1404, 1
    %v1406 = vmax.f32 %v1404, %v1405
    %v1407 = vsel %vm1280, %v1102, -inf
    %v1408 = vsel %vm1280, %v1107, -inf
    %v1409 = vmax.f32 %v1407, %v1408
    %v1410 = vrot.slane %v1409, 4
    %v1411 = vmax.f32 %v1409, %v1410
    %v1412 = vrot.slane %v1411, 2
    %v1413 = vmax.f32 %v1411, %v1412
    %v1414 = vrot.slane %v1413, 1
    %v1415 = vmax.f32 %v1413, %v1414
    %v1416 = vsel %vm1280, %v1112, -inf
    %v1417 = vsel %vm1280, %v1117, -inf
    %v1418 = vmax.f32 %v1416, %v1417
    %v1419 = vrot.slane %v1418, 4
    %v1420 = vmax.f32 %v1418, %v1419
    %v1421 = vrot.slane %v1420, 2
    %v1422 = vmax.f32 %v1420, %v1421
    %v1423 = vrot.slane %v1422, 1
    %v1424 = vmax.f32 %v1422, %v1423
    %v1425 = vsel %vm1280, %v1122, -inf
    %v1426 = vsel %vm1280, %v1127, -inf
    %v1427 = vmax.f32 %v1425, %v1426
    %v1428 = vrot.slane %v1427, 4
    %v1429 = vmax.f32 %v1427, %v1428
    %v1430 = vrot.slane %v1429, 2
    %v1431 = vmax.f32 %v1429, %v1430
    %v1432 = vrot.slane %v1431, 1
    %v1433 = vmax.f32 %v1431, %v1432
    %v1434 = vsel %vm1280, %v1132, -inf
    %v1435 = vsel %vm1280, %v1137, -inf
    %v1436 = vmax.f32 %v1434, %v1435
    %v1437 = vrot.slane %v1436, 4
    %v1438 = vmax.f32 %v1436, %v1437
    %v1439 = vrot.slane %v1438, 2
    %v1440 = vmax.f32 %v1438, %v1439
    %v1441 = vrot.slane %v1440, 1
    %v1442 = vmax.f32 %v1440, %v1441
    %v1443 = vsel %vm1280, %v1142, -inf
    %v1444 = vsel %vm1280, %v1147, -inf
    %v1445 = vmax.f32 %v1443, %v1444
    %v1446 = vrot.slane %v1445, 4
    %v1447 = vmax.f32 %v1445, %v1446
    %v1448 = vrot.slane %v1447, 2
    %v1449 = vmax.f32 %v1447, %v1448
    %v1450 = vrot.slane %v1449, 1
    %v1451 = vmax.f32 %v1449, %v1450
    %v1452 = vsel %vm1280, %v1152, -inf
    %v1453 = vsel %vm1280, %v1157, -inf
    %v1454 = vmax.f32 %v1452, %v1453
    %v1455 = vrot.slane %v1454, 4
    %v1456 = vmax.f32 %v1454, %v1455
    %v1457 = vrot.slane %v1456, 2
    %v1458 = vmax.f32 %v1456, %v1457
    %v1459 = vrot.slane %v1458, 1
    %v1460 = vmax.f32 %v1458, %v1459
    %v1461 = vsel %vm1280, %v1162, -inf
    %v1462 = vsel %vm1280, %v1167, -inf
    %v1463 = vmax.f32 %v1461, %v1462
    %v1464 = vrot.slane %v1463, 4
    %v1465 = vmax.f32 %v1463, %v1464
    %v1466 = vrot.slane %v1465, 2
    %v1467 = vmax.f32 %v1465, %v1466
    %v1468 = vrot.slane %v1467, 1
    %v1469 = vmax.f32 %v1467, %v1468
    %v1470 = vsel %vm1280, %v1172, -inf
    %v1471 = vsel %vm1280, %v1177, -inf
    %v1472 = vmax.f32 %v1470, %v1471
    %v1473 = vrot.slane %v1472, 4
    %v1474 = vmax.f32 %v1472, %v1473
    %v1475 = vrot.slane %v1474, 2
    %v1476 = vmax.f32 %v1474, %v1475
    %v1477 = vrot.slane %v1476, 1
    %v1478 = vmax.f32 %v1476, %v1477
    %v1479 = vsel %vm1280, %v1182, -inf
    %v1480 = vsel %vm1280, %v1187, -inf
    %v1481 = vmax.f32 %v1479, %v1480
    %v1482 = vrot.slane %v1481, 4
    %v1483 = vmax.f32 %v1481, %v1482
    %v1484 = vrot.slane %v1483, 2
    %v1485 = vmax.f32 %v1483, %v1484
    %v1486 = vrot.slane %v1485, 1
    %v1487 = vmax.f32 %v1485, %v1486
    %v1488 = vsel %vm1280, %v1192, -inf
    %v1489 = vsel %vm1280, %v1197, -inf
    %v1490 = vmax.f32 %v1488, %v1489
    %v1491 = vrot.slane %v1490, 4
    %v1492 = vmax.f32 %v1490, %v1491
    %v1493 = vrot.slane %v1492, 2
    %v1494 = vmax.f32 %v1492, %v1493
    %v1495 = vrot.slane %v1494, 1
    %v1496 = vmax.f32 %v1494, %v1495
    %v1497 = vsel %vm1280, %v1202, -inf
    %v1498 = vsel %vm1280, %v1207, -inf
    %v1499 = vmax.f32 %v1497, %v1498
    %v1500 = vrot.slane %v1499, 4
    %v1501 = vmax.f32 %v1499, %v1500
    %v1502 = vrot.slane %v1501, 2
    %v1503 = vmax.f32 %v1501, %v1502
    %v1504 = vrot.slane %v1503, 1
    %v1505 = vmax.f32 %v1503, %v1504
    %v1506 = vsel %vm1280, %v1212, -inf
    %v1507 = vsel %vm1280, %v1217, -inf
    %v1508 = vmax.f32 %v1506, %v1507
    %v1509 = vrot.slane %v1508, 4
    %v1510 = vmax.f32 %v1508, %v1509
    %v1511 = vrot.slane %v1510, 2
    %v1512 = vmax.f32 %v1510, %v1511
    %v1513 = vrot.slane %v1512, 1
    %v1514 = vmax.f32 %v1512, %v1513
    %v1515 = vsel %vm1280, %v1222, -inf
    %v1516 = vsel %vm1280, %v1227, -inf
    %v1517 = vmax.f32 %v1515, %v1516
    %v1518 = vrot.slane %v1517, 4
    %v1519 = vmax.f32 %v1517, %v1518
    %v1520 = vrot.slane %v1519, 2
    %v1521 = vmax.f32 %v1519, %v1520
    %v1522 = vrot.slane %v1521, 1
    %v1523 = vmax.f32 %v1521, %v1522
    %v1524 = vsel %vm1280, %v1232, -inf
    %v1525 = vsel %vm1280, %v1237, -inf
    %v1526 = vmax.f32 %v1524, %v1525
    %v1527 = vrot.slane %v1526, 4
    %v1528 = vmax.f32 %v1526, %v1527
    %v1529 = vrot.slane %v1528, 2
    %v1530 = vmax.f32 %v1528, %v1529
    %v1531 = vrot.slane %v1530, 1
    %v1532 = vmax.f32 %v1530, %v1531
    %v1533 = vsel %vm1280, %v1242, -inf
    %v1534 = vsel %vm1280, %v1247, -inf
    %v1535 = vmax.f32 %v1533, %v1534
    %v1536 = vrot.slane %v1535, 4
    %v1537 = vmax.f32 %v1535, %v1536
    %v1538 = vrot.slane %v1537, 2
    %v1539 = vmax.f32 %v1537, %v1538
    %v1540 = vrot.slane %v1539, 1
    %v1541 = vmax.f32 %v1539, %v1540
    %v1542 = vsel %vm1280, %v1252, -inf
    %v1543 = vsel %vm1280, %v1257, -inf
    %v1544 = vmax.f32 %v1542, %v1543
    %v1545 = vrot.slane %v1544, 4
    %v1546 = vmax.f32 %v1544, %v1545
    %v1547 = vrot.slane %v1546, 2
    %v1548 = vmax.f32 %v1546, %v1547
    %v1549 = vrot.slane %v1548, 1
    %v1550 = vmax.f32 %v1548, %v1549
    %v1551 = vsel %vm1280, %v1262, -inf
    %v1552 = vsel %vm1280, %v1267, -inf
    %v1553 = vmax.f32 %v1551, %v1552
    %v1554 = vrot.slane %v1553, 4
    %v1555 = vmax.f32 %v1553, %v1554
    %v1556 = vrot.slane %v1555, 2
    %v1557 = vmax.f32 %v1555, %v1556
    %v1558 = vrot.slane %v1557, 1
    %v1559 = vmax.f32 %v1557, %v1558
    %v1560 = vsel %vm1280, %v1272, -inf
    %v1561 = vsel %vm1280, %v1277, -inf
    %v1562 = vmax.f32 %v1560, %v1561
    %v1563 = vrot.slane %v1562, 4
    %v1564 = vmax.f32 %v1562, %v1563
    %v1565 = vrot.slane %v1564, 2
    %v1566 = vmax.f32 %v1564, %v1565
    %v1567 = vrot.slane %v1566, 1
    %v1568 = vmax.f32 %v1566, %v1567
    %v1569 = vsub.f32 %v962, %v1289
    %v1570 = vsub.f32 %v967, %v1289
    %v1571 = vsub.f32 %v972, %v1298
    %v1572 = vsub.f32 %v977, %v1298
    %v1573 = vsub.f32 %v982, %v1307
    %v1574 = vsub.f32 %v987, %v1307
    %v1575 = vsub.f32 %v992, %v1316
    %v1576 = vsub.f32 %v997, %v1316
    %v1577 = vsub.f32 %v1002, %v1325
    %v1578 = vsub.f32 %v1007, %v1325
    %v1579 = vsub.f32 %v1012, %v1334
    %v1580 = vsub.f32 %v1017, %v1334
    %v1581 = vsub.f32 %v1022, %v1343
    %v1582 = vsub.f32 %v1027, %v1343
    %v1583 = vsub.f32 %v1032, %v1352
    %v1584 = vsub.f32 %v1037, %v1352
    %v1585 = vsub.f32 %v1042, %v1361
    %v1586 = vsub.f32 %v1047, %v1361
    %v1587 = vsub.f32 %v1052, %v1370
    %v1588 = vsub.f32 %v1057, %v1370
    %v1589 = vsub.f32 %v1062, %v1379
    %v1590 = vsub.f32 %v1067, %v1379
    %v1591 = vsub.f32 %v1072, %v1388
    %v1592 = vsub.f32 %v1077, %v1388
    %v1593 = vsub.f32 %v1082, %v1397
    %v1594 = vsub.f32 %v1087, %v1397
    %v1595 = vsub.f32 %v1092, %v1406
    %v1596 = vsub.f32 %v1097, %v1406
    %v1597 = vsub.f32 %v1102, %v1415
    %v1598 = vsub.f32 %v1107, %v1415
    %v1599 = vsub.f32 %v1112, %v1424
    %v1600 = vsub.f32 %v1117, %v1424
    %v1601 = vsub.f32 %v1122, %v1433
    %v1602 = vsub.f32 %v1127, %v1433
    %v1603 = vsub.f32 %v1132, %v1442
    %v1604 = vsub.f32 %v1137, %v1442
    %v1605 = vsub.f32 %v1142, %v1451
    %v1606 = vsub.f32 %v1147, %v1451
    %v1607 = vsub.f32 %v1152, %v1460
    %v1608 = vsub.f32 %v1157, %v1460
    %v1609 = vsub.f32 %v1162, %v1469
    %v1610 = vsub.f32 %v1167, %v1469
    %v1611 = vsub.f32 %v1172, %v1478
    %v1612 = vsub.f32 %v1177, %v1478
    %v1613 = vsub.f32 %v1182, %v1487
    %v1614 = vsub.f32 %v1187, %v1487
    %v1615 = vsub.f32 %v1192, %v1496
    %v1616 = vsub.f32 %v1197, %v1496
    %v1617 = vsub.f32 %v1202, %v1505
    %v1618 = vsub.f32 %v1207, %v1505
    %v1619 = vsub.f32 %v1212, %v1514
    %v1620 = vsub.f32 %v1217, %v1514
    %v1621 = vsub.f32 %v1222, %v1523
    %v1622 = vsub.f32 %v1227, %v1523
    %v1623 = vsub.f32 %v1232, %v1532
    %v1624 = vsub.f32 %v1237, %v1532
    %v1625 = vsub.f32 %v1242, %v1541
    %v1626 = vsub.f32 %v1247, %v1541
    %v1627 = vsub.f32 %v1252, %v1550
    %v1628 = vsub.f32 %v1257, %v1550
    %v1629 = vsub.f32 %v1262, %v1559
    %v1630 = vsub.f32 %v1267, %v1559
    %v1631 = vsub.f32 %v1272, %v1568
    %v1632 = vsub.f32 %v1277, %v1568
    %v1633 = vmul.f32 %v1569, 1.442695
    %v1634 = vpow.pop %v1633
    %v1635 = vmul.f32 %v1570, 1.442695
    %v1636 = vpow.pop %v1635
    %v1637 = vmul.f32 %v1571, 1.442695
    %v1638 = vpow.pop %v1637
    %v1639 = vmul.f32 %v1572, 1.442695
    %v1640 = vpow.pop %v1639
    %v1641 = vmul.f32 %v1573, 1.442695
    %v1642 = vpow.pop %v1641
    %v1643 = vmul.f32 %v1574, 1.442695
    %v1644 = vpow.pop %v1643
    %v1645 = vmul.f32 %v1575, 1.442695
    %v1646 = vpow.pop %v1645
    %v1647 = vmul.f32 %v1576, 1.442695
    %v1648 = vpow.pop %v1647
    %v1649 = vmul.f32 %v1577, 1.442695
    %v1650 = vpow.pop %v1649
    %v1651 = vmul.f32 %v1578, 1.442695
    %v1652 = vpow.pop %v1651
    %v1653 = vmul.f32 %v1579, 1.442695
    %v1654 = vpow.pop %v1653
    %v1655 = vmul.f32 %v1580, 1.442695
    %v1656 = vpow.pop %v1655
    %v1657 = vmul.f32 %v1581, 1.442695
    %v1658 = vpow.pop %v1657
    %v1659 = vmul.f32 %v1582, 1.442695
    %v1660 = vpow.pop %v1659
    %v1661 = vmul.f32 %v1583, 1.442695
    %v1662 = vpow.pop %v1661
    %v1663 = vmul.f32 %v1584, 1.442695
    %v1664 = vpow.pop %v1663
    %v1665 = vmul.f32 %v1585, 1.442695
    %v1666 = vpow.pop %v1665
    %v1667 = vmul.f32 %v1586, 1.442695
    %v1668 = vpow.pop %v1667
    %v1669 = vmul.f32 %v1587, 1.442695
    %v1670 = vpow.pop %v1669
    %v1671 = vmul.f32 %v1588, 1.442695
    %v1672 = vpow.pop %v1671
    %v1673 = vmul.f32 %v1589, 1.442695
    %v1674 = vpow.pop %v1673
    %v1675 = vmul.f32 %v1590, 1.442695
    %v1676 = vpow.pop %v1675
    %v1677 = vmul.f32 %v1591, 1.442695
    %v1678 = vpow.pop %v1677
    %v1679 = vmul.f32 %v1592, 1.442695
    %v1680 = vpow.pop %v1679
    %v1681 = vmul.f32 %v1593, 1.442695
    %v1682 = vpow.pop %v1681
    %v1683 = vmul.f32 %v1594, 1.442695
    %v1684 = vpow.pop %v1683
    %v1685 = vmul.f32 %v1595, 1.442695
    %v1686 = vpow.pop %v1685
    %v1687 = vmul.f32 %v1596, 1.442695
    %v1688 = vpow.pop %v1687
    %v1689 = vmul.f32 %v1597, 1.442695
    %v1690 = vpow.pop %v1689
    %v1691 = vmul.f32 %v1598, 1.442695
    %v1692 = vpow.pop %v1691
    %v1693 = vmul.f32 %v1599, 1.442695
    %v1694 = vpow.pop %v1693
    %v1695 = vmul.f32 %v1600, 1.442695
    %v1696 = vpow.pop %v1695
    %v1697 = vmul.f32 %v1601, 1.442695
    %v1698 = vpow.pop %v1697
    %v1699 = vmul.f32 %v1602, 1.442695
    %v1700 = vpow.pop %v1699
    %v1701 = vmul.f32 %v1603, 1.442695
    %v1702 = vpow.pop %v1701
    %v1703 = vmul.f32 %v1604, 1.442695
    %v1704 = vpow.pop %v1703
    %v1705 = vmul.f32 %v1605, 1.442695
    %v1706 = vpow.pop %v1705
    %v1707 = vmul.f32 %v1606, 1.442695
    %v1708 = vpow.pop %v1707
    %v1709 = vmul.f32 %v1607, 1.442695
    %v1710 = vpow.pop %v1709
    %v1711 = vmul.f32 %v1608, 1.442695
    %v1712 = vpow.pop %v1711
    %v1713 = vmul.f32 %v1609, 1.442695
    %v1714 = vpow.pop %v1713
    %v1715 = vmul.f32 %v1610, 1.442695
    %v1716 = vpow.pop %v1715
    %v1717 = vmul.f32 %v1611, 1.442695
    %v1718 = vpow.pop %v1717
    %v1719 = vmul.f32 %v1612, 1.442695
    %v1720 = vpow.pop %v1719
    %v1721 = vmul.f32 %v1613, 1.442695
    %v1722 = vpow.pop %v1721
    %v1723 = vmul.f32 %v1614, 1.442695
    %v1724 = vpow.pop %v1723
    %v1725 = vmul.f32 %v1615, 1.442695
    %v1726 = vpow.pop %v1725
    %v1727 = vmul.f32 %v1616, 1.442695
    %v1728 = vpow.pop %v1727
    %v1729 = vmul.f32 %v1617, 1.442695
    %v1730 = vpow.pop %v1729
    %v1731 = vmul.f32 %v1618, 1.442695
    %v1732 = vpow.pop %v1731
    %v1733 = vmul.f32 %v1619, 1.442695
    %v1734 = vpow.pop %v1733
    %v1735 = vmul.f32 %v1620, 1.442695
    %v1736 = vpow.pop %v1735
    %v1737 = vmul.f32 %v1621, 1.442695
    %v1738 = vpow.pop %v1737
    %v1739 = vmul.f32 %v1622, 1.442695
    %v1740 = vpow.pop %v1739
    %v1741 = vmul.f32 %v1623, 1.442695
    %v1742 = vpow.pop %v1741
    %v1743 = vmul.f32 %v1624, 1.442695
    %v1744 = vpow.pop %v1743
    %v1745 = vmul.f32 %v1625, 1.442695
    %v1746 = vpow.pop %v1745
    %v1747 = vmul.f32 %v1626, 1.442695
    %v1748 = vpow.pop %v1747
    %v1749 = vmul.f32 %v1627, 1.442695
    %v1750 = vpow.pop %v1749
    %v1751 = vmul.f32 %v1628, 1.442695
    %v1752 = vpow.pop %v1751
    %v1753 = vmul.f32 %v1629, 1.442695
    %v1754 = vpow.pop %v1753
    %v1755 = vmul.f32 %v1630, 1.442695
    %v1756 = vpow.pop %v1755
    %v1757 = vmul.f32 %v1631, 1.442695
    %v1758 = vpow.pop %v1757
    %v1759 = vmul.f32 %v1632, 1.442695
    %v1760 = vpow.pop %v1759
    %v1761 = vsel %vm1280, %v1634, 0.0
    %v1762 = vsel %vm1280, %v1636, 0.0
    %v1763 = vadd.f32 %v1761, %v1762
    %v1764 = vrot.slane %v1763, 4
    %v1765 = vadd.f32 %v1763, %v1764
    %v1766 = vrot.slane %v1765, 2
    %v1767 = vadd.f32 %v1765, %v1766
    %v1768 = vrot.slane %v1767, 1
    %v1769 = vadd.f32 %v1767, %v1768
    %v1770 = vsel %vm1280, %v1638, 0.0
    %v1771 = vsel %vm1280, %v1640, 0.0
    %v1772 = vadd.f32 %v1770, %v1771
    %v1773 = vrot.slane %v1772, 4
    %v1774 = vadd.f32 %v1772, %v1773
    %v1775 = vrot.slane %v1774, 2
    %v1776 = vadd.f32 %v1774, %v1775
    %v1777 = vrot.slane %v1776, 1
    %v1778 = vadd.f32 %v1776, %v1777
    %v1779 = vsel %vm1280, %v1642, 0.0
    %v1780 = vsel %vm1280, %v1644, 0.0
    %v1781 = vadd.f32 %v1779, %v1780
    %v1782 = vrot.slane %v1781, 4
    %v1783 = vadd.f32 %v1781, %v1782
    %v1784 = vrot.slane %v1783, 2
    %v1785 = vadd.f32 %v1783, %v1784
    %v1786 = vrot.slane %v1785, 1
    %v1787 = vadd.f32 %v1785, %v1786
    %v1788 = vsel %vm1280, %v1646, 0.0
    %v1789 = vsel %vm1280, %v1648, 0.0
    %v1790 = vadd.f32 %v1788, %v1789
    %v1791 = vrot.slane %v1790, 4
    %v1792 = vadd.f32 %v1790, %v1791
    %v1793 = vrot.slane %v1792, 2
    %v1794 = vadd.f32 %v1792, %v1793
    %v1795 = vrot.slane %v1794, 1
    %v1796 = vadd.f32 %v1794, %v1795
    %v1797 = vsel %vm1280, %v1650, 0.0
    %v1798 = vsel %vm1280, %v1652, 0.0
    %v1799 = vadd.f32 %v1797, %v1798
    %v1800 = vrot.slane %v1799, 4
    %v1801 = vadd.f32 %v1799, %v1800
    %v1802 = vrot.slane %v1801, 2
    %v1803 = vadd.f32 %v1801, %v1802
    %v1804 = vrot.slane %v1803, 1
    %v1805 = vadd.f32 %v1803, %v1804
    %v1806 = vsel %vm1280, %v1654, 0.0
    %v1807 = vsel %vm1280, %v1656, 0.0
    %v1808 = vadd.f32 %v1806, %v1807
    %v1809 = vrot.slane %v1808, 4
    %v1810 = vadd.f32 %v1808, %v1809
    %v1811 = vrot.slane %v1810, 2
    %v1812 = vadd.f32 %v1810, %v1811
    %v1813 = vrot.slane %v1812, 1
    %v1814 = vadd.f32 %v1812, %v1813
    %v1815 = vsel %vm1280, %v1658, 0.0
    %v1816 = vsel %vm1280, %v1660, 0.0
    %v1817 = vadd.f32 %v1815, %v1816
    %v1818 = vrot.slane %v1817, 4
    %v1819 = vadd.f32 %v1817, %v1818
    %v1820 = vrot.slane %v1819, 2
    %v1821 = vadd.f32 %v1819, %v1820
    %v1822 = vrot.slane %v1821, 1
    %v1823 = vadd.f32 %v1821, %v1822
    %v1824 = vsel %vm1280, %v1662, 0.0
    %v1825 = vsel %vm1280, %v1664, 0.0
    %v1826 = vadd.f32 %v1824, %v1825
    %v1827 = vrot.slane %v1826, 4
    %v1828 = vadd.f32 %v1826, %v1827
    %v1829 = vrot.slane %v1828, 2
    %v1830 = vadd.f32 %v1828, %v1829
    %v1831 = vrot.slane %v1830, 1
    %v1832 = vadd.f32 %v1830, %v1831
    %v1833 = vsel %vm1280, %v1666, 0.0
    %v1834 = vsel %vm1280, %v1668, 0.0
    %v1835 = vadd.f32 %v1833, %v1834
    %v1836 = vrot.slane %v1835, 4
    %v1837 = vadd.f32 %v1835, %v1836
    %v1838 = vrot.slane %v1837, 2
    %v1839 = vadd.f32 %v1837, %v1838
    %v1840 = vrot.slane %v1839, 1
    %v1841 = vadd.f32 %v1839, %v1840
    %v1842 = vsel %vm1280, %v1670, 0.0
    %v1843 = vsel %vm1280, %v1672, 0.0
    %v1844 = vadd.f32 %v1842, %v1843
    %v1845 = vrot.slane %v1844, 4
    %v1846 = vadd.f32 %v1844, %v1845
    %v1847 = vrot.slane %v1846, 2
    %v1848 = vadd.f32 %v1846, %v1847
    %v1849 = vrot.slane %v1848, 1
    %v1850 = vadd.f32 %v1848, %v1849
    %v1851 = vsel %vm1280, %v1674, 0.0
    %v1852 = vsel %vm1280, %v1676, 0.0
    %v1853 = vadd.f32 %v1851, %v1852
    %v1854 = vrot.slane %v1853, 4
    %v1855 = vadd.f32 %v1853, %v1854
    %v1856 = vrot.slane %v1855, 2
    %v1857 = vadd.f32 %v1855, %v1856
    %v1858 = vrot.slane %v1857, 1
    %v1859 = vadd.f32 %v1857, %v1858
    %v1860 = vsel %vm1280, %v1678, 0.0
    %v1861 = vsel %vm1280, %v1680, 0.0
    %v1862 = vadd.f32 %v1860, %v1861
    %v1863 = vrot.slane %v1862, 4
    %v1864 = vadd.f32 %v1862, %v1863
    %v1865 = vrot.slane %v1864, 2
    %v1866 = vadd.f32 %v1864, %v1865
    %v1867 = vrot.slane %v1866, 1
    %v1868 = vadd.f32 %v1866, %v1867
    %v1869 = vsel %vm1280, %v1682, 0.0
    %v1870 = vsel %vm1280, %v1684, 0.0
    %v1871 = vadd.f32 %v1869, %v1870
    %v1872 = vrot.slane %v1871, 4
    %v1873 = vadd.f32 %v1871, %v1872
    %v1874 = vrot.slane %v1873, 2
    %v1875 = vadd.f32 %v1873, %v1874
    %v1876 = vrot.slane %v1875, 1
    %v1877 = vadd.f32 %v1875, %v1876
    %v1878 = vsel %vm1280, %v1686, 0.0
    %v1879 = vsel %vm1280, %v1688, 0.0
    %v1880 = vadd.f32 %v1878, %v1879
    %v1881 = vrot.slane %v1880, 4
    %v1882 = vadd.f32 %v1880, %v1881
    %v1883 = vrot.slane %v1882, 2
    %v1884 = vadd.f32 %v1882, %v1883
    %v1885 = vrot.slane %v1884, 1
    %v1886 = vadd.f32 %v1884, %v1885
    %v1887 = vsel %vm1280, %v1690, 0.0
    %v1888 = vsel %vm1280, %v1692, 0.0
    %v1889 = vadd.f32 %v1887, %v1888
    %v1890 = vrot.slane %v1889, 4
    %v1891 = vadd.f32 %v1889, %v1890
    %v1892 = vrot.slane %v1891, 2
    %v1893 = vadd.f32 %v1891, %v1892
    %v1894 = vrot.slane %v1893, 1
    %v1895 = vadd.f32 %v1893, %v1894
    %v1896 = vsel %vm1280, %v1694, 0.0
    %v1897 = vsel %vm1280, %v1696, 0.0
    %v1898 = vadd.f32 %v1896, %v1897
    %v1899 = vrot.slane %v1898, 4
    %v1900 = vadd.f32 %v1898, %v1899
    %v1901 = vrot.slane %v1900, 2
    %v1902 = vadd.f32 %v1900, %v1901
    %v1903 = vrot.slane %v1902, 1
    %v1904 = vadd.f32 %v1902, %v1903
    %v1905 = vsel %vm1280, %v1698, 0.0
    %v1906 = vsel %vm1280, %v1700, 0.0
    %v1907 = vadd.f32 %v1905, %v1906
    %v1908 = vrot.slane %v1907, 4
    %v1909 = vadd.f32 %v1907, %v1908
    %v1910 = vrot.slane %v1909, 2
    %v1911 = vadd.f32 %v1909, %v1910
    %v1912 = vrot.slane %v1911, 1
    %v1913 = vadd.f32 %v1911, %v1912
    %v1914 = vsel %vm1280, %v1702, 0.0
    %v1915 = vsel %vm1280, %v1704, 0.0
    %v1916 = vadd.f32 %v1914, %v1915
    %v1917 = vrot.slane %v1916, 4
    %v1918 = vadd.f32 %v1916, %v1917
    %v1919 = vrot.slane %v1918, 2
    %v1920 = vadd.f32 %v1918, %v1919
    %v1921 = vrot.slane %v1920, 1
    %v1922 = vadd.f32 %v1920, %v1921
    %v1923 = vsel %vm1280, %v1706, 0.0
    %v1924 = vsel %vm1280, %v1708, 0.0
    %v1925 = vadd.f32 %v1923, %v1924
    %v1926 = vrot.slane %v1925, 4
    %v1927 = vadd.f32 %v1925, %v1926
    %v1928 = vrot.slane %v1927, 2
    %v1929 = vadd.f32 %v1927, %v1928
    %v1930 = vrot.slane %v1929, 1
    %v1931 = vadd.f32 %v1929, %v1930
    %v1932 = vsel %vm1280, %v1710, 0.0
    %v1933 = vsel %vm1280, %v1712, 0.0
    %v1934 = vadd.f32 %v1932, %v1933
    %v1935 = vrot.slane %v1934, 4
    %v1936 = vadd.f32 %v1934, %v1935
    %v1937 = vrot.slane %v1936, 2
    %v1938 = vadd.f32 %v1936, %v1937
    %v1939 = vrot.slane %v1938, 1
    %v1940 = vadd.f32 %v1938, %v1939
    %v1941 = vsel %vm1280, %v1714, 0.0
    %v1942 = vsel %vm1280, %v1716, 0.0
    %v1943 = vadd.f32 %v1941, %v1942
    %v1944 = vrot.slane %v1943, 4
    %v1945 = vadd.f32 %v1943, %v1944
    %v1946 = vrot.slane %v1945, 2
    %v1947 = vadd.f32 %v1945, %v1946
    %v1948 = vrot.slane %v1947, 1
    %v1949 = vadd.f32 %v1947, %v1948
    %v1950 = vsel %vm1280, %v1718, 0.0
    %v1951 = vsel %vm1280, %v1720, 0.0
    %v1952 = vadd.f32 %v1950, %v1951
    %v1953 = vrot.slane %v1952, 4
    %v1954 = vadd.f32 %v1952, %v1953
    %v1955 = vrot.slane %v1954, 2
    %v1956 = vadd.f32 %v1954, %v1955
    %v1957 = vrot.slane %v1956, 1
    %v1958 = vadd.f32 %v1956, %v1957
    %v1959 = vsel %vm1280, %v1722, 0.0
    %v1960 = vsel %vm1280, %v1724, 0.0
    %v1961 = vadd.f32 %v1959, %v1960
    %v1962 = vrot.slane %v1961, 4
    %v1963 = vadd.f32 %v1961, %v1962
    %v1964 = vrot.slane %v1963, 2
    %v1965 = vadd.f32 %v1963, %v1964
    %v1966 = vrot.slane %v1965, 1
    %v1967 = vadd.f32 %v1965, %v1966
    %v1968 = vsel %vm1280, %v1726, 0.0
    %v1969 = vsel %vm1280, %v1728, 0.0
    %v1970 = vadd.f32 %v1968, %v1969
    %v1971 = vrot.slane %v1970, 4
    %v1972 = vadd.f32 %v1970, %v1971
    %v1973 = vrot.slane %v1972, 2
    %v1974 = vadd.f32 %v1972, %v1973
    %v1975 = vrot.slane %v1974, 1
    %v1976 = vadd.f32 %v1974, %v1975
    %v1977 = vsel %vm1280, %v1730, 0.0
    %v1978 = vsel %vm1280, %v1732, 0.0
    %v1979 = vadd.f32 %v1977, %v1978
    %v1980 = vrot.slane %v1979, 4
    %v1981 = vadd.f32 %v1979, %v1980
    %v1982 = vrot.slane %v1981, 2
    %v1983 = vadd.f32 %v1981, %v1982
    %v1984 = vrot.slane %v1983, 1
    %v1985 = vadd.f32 %v1983, %v1984
    %v1986 = vsel %vm1280, %v1734, 0.0
    %v1987 = vsel %vm1280, %v1736, 0.0
    %v1988 = vadd.f32 %v1986, %v1987
    %v1989 = vrot.slane %v1988, 4
    %v1990 = vadd.f32 %v1988, %v1989
    %v1991 = vrot.slane %v1990, 2
    %v1992 = vadd.f32 %v1990, %v1991
    %v1993 = vrot.slane %v1992, 1
    %v1994 = vadd.f32 %v1992, %v1993
    %v1995 = vsel %vm1280, %v1738, 0.0
    %v1996 = vsel %vm1280, %v1740, 0.0
    %v1997 = vadd.f32 %v1995, %v1996
    %v1998 = vrot.slane %v1997, 4
    %v1999 = vadd.f32 %v1997, %v1998
    %v2000 = vrot.slane %v1999, 2
    %v2001 = vadd.f32 %v1999, %v2000
    %v2002 = vrot.slane %v2001, 1
    %v2003 = vadd.f32 %v2001, %v2002
    %v2004 = vsel %vm1280, %v1742, 0.0
    %v2005 = vsel %vm1280, %v1744, 0.0
    %v2006 = vadd.f32 %v2004, %v2005
    %v2007 = vrot.slane %v2006, 4
    %v2008 = vadd.f32 %v2006, %v2007
    %v2009 = vrot.slane %v2008, 2
    %v2010 = vadd.f32 %v2008, %v2009
    %v2011 = vrot.slane %v2010, 1
    %v2012 = vadd.f32 %v2010, %v2011
    %v2013 = vsel %vm1280, %v1746, 0.0
    %v2014 = vsel %vm1280, %v1748, 0.0
    %v2015 = vadd.f32 %v2013, %v2014
    %v2016 = vrot.slane %v2015, 4
    %v2017 = vadd.f32 %v2015, %v2016
    %v2018 = vrot.slane %v2017, 2
    %v2019 = vadd.f32 %v2017, %v2018
    %v2020 = vrot.slane %v2019, 1
    %v2021 = vadd.f32 %v2019, %v2020
    %v2022 = vsel %vm1280, %v1750, 0.0
    %v2023 = vsel %vm1280, %v1752, 0.0
    %v2024 = vadd.f32 %v2022, %v2023
    %v2025 = vrot.slane %v2024, 4
    %v2026 = vadd.f32 %v2024, %v2025
    %v2027 = vrot.slane %v2026, 2
    %v2028 = vadd.f32 %v2026, %v2027
    %v2029 = vrot.slane %v2028, 1
    %v2030 = vadd.f32 %v2028, %v2029
    %v2031 = vsel %vm1280, %v1754, 0.0
    %v2032 = vsel %vm1280, %v1756, 0.0
    %v2033 = vadd.f32 %v2031, %v2032
    %v2034 = vrot.slane %v2033, 4
    %v2035 = vadd.f32 %v2033, %v2034
    %v2036 = vrot.slane %v2035, 2
    %v2037 = vadd.f32 %v2035, %v2036
    %v2038 = vrot.slane %v2037, 1
    %v2039 = vadd.f32 %v2037, %v2038
    %v2040 = vsel %vm1280, %v1758, 0.0
    %v2041 = vsel %vm1280, %v1760, 0.0
    %v2042 = vadd.f32 %v2040, %v2041
    %v2043 = vrot.slane %v2042, 4
    %v2044 = vadd.f32 %v2042, %v2043
    %v2045 = vrot.slane %v2044, 2
    %v2046 = vadd.f32 %v2044, %v2045
    %v2047 = vrot.slane %v2046, 1
    %v2048 = vadd.f32 %v2046, %v2047
    %v2049 = vrcp.pop %v1769
    %v2050 = vrcp.pop %v1778
    %v2051 = vrcp.pop %v1787
    %v2052 = vrcp.pop %v1796
    %v2053 = vrcp.pop %v1805
    %v2054 = vrcp.pop %v1814
    %v2055 = vrcp.pop %v1823
    %v2056 = vrcp.pop %v1832
    %v2057 = vrcp.pop %v1841
    %v2058 = vrcp.pop %v1850
    %v2059 = vrcp.pop %v1859
    %v2060 = vrcp.pop %v1868
    %v2061 = vrcp.pop %v1877
    %v2062 = vrcp.pop %v1886
    %v2063 = vrcp.pop %v1895
    %v2064 = vrcp.pop %v1904
    %v2065 = vrcp.pop %v1913
    %v2066 = vrcp.pop %v1922
    %v2067 = vrcp.pop %v1931
    %v2068 = vrcp.pop %v1940
    %v2069 = vrcp.pop %v1949
    %v2070 = vrcp.pop %v1958
    %v2071 = vrcp.pop %v1967
    %v2072 = vrcp.pop %v1976
    %v2073 = vrcp.pop %v1985
    %v2074 = vrcp.pop %v1994
    %v2075 = vrcp.pop %v2003
    %v2076 = vrcp.pop %v2012
    %v2077 = vrcp.pop %v2021
    %v2078 = vrcp.pop %v2030
    %v2079 = vrcp.pop %v2039
    %v2080 = vrcp.pop %v2048
    %v2081 = vmul.f32 %v1634, %v2049
    %v2082 = vmul.f32 %v1636, %v2049
    %v2083 = vmul.f32 %v1638, %v2050
    %v2084 = vmul.f32 %v1640, %v2050
    %v2085 = vmul.f32 %v1642, %v2051
    %v2086 = vmul.f32 %v1644, %v2051
    %v2087 = vmul.f32 %v1646, %v2052
    %v2088 = vmul.f32 %v1648, %v2052
    %v2089 = vmul.f32 %v1650, %v2053
    %v2090 = vmul.f32 %v1652, %v2053
    %v2091 = vmul.f32 %v1654, %v2054
    %v2092 = vmul.f32 %v1656, %v2054
    %v2093 = vmul.f32 %v1658, %v2055
    %v2094 = vmul.f32 %v1660, %v2055
    %v2095 = vmul.f32 %v1662, %v2056
    %v2096 = vmul.f32 %v1664, %v2056
    %v2097 = vmul.f32 %v1666, %v2057
    %v2098 = vmul.f32 %v1668, %v2057
    %v2099 = vmul.f32 %v1670, %v2058
    %v2100 = vmul.f32 %v1672, %v2058
    %v2101 = vmul.f32 %v1674, %v2059
    %v2102 = vmul.f32 %v1676, %v2059
    %v2103 = vmul.f32 %v1678, %v2060
    %v2104 = vmul.f32 %v1680, %v2060
    %v2105 = vmul.f32 %v1682, %v2061
    %v2106 = vmul.f32 %v1684, %v2061
    %v2107 = vmul.f32 %v1686, %v2062
    %v2108 = vmul.f32 %v1688, %v2062
    %v2109 = vmul.f32 %v1690, %v2063
    %v2110 = vmul.f32 %v1692, %v2063
    %v2111 = vmul.f32 %v1694, %v2064
    %v2112 = vmul.f32 %v1696, %v2064
    %v2113 = vmul.f32 %v1698, %v2065
    %v2114 = vmul.f32 %v1700, %v2065
    %v2115 = vmul.f32 %v1702, %v2066
    %v2116 = vmul.f32 %v1704, %v2066
    %v2117 = vmul.f32 %v1706, %v2067
    %v2118 = vmul.f32 %v1708, %v2067
    %v2119 = vmul.f32 %v1710, %v2068
    %v2120 = vmul.f32 %v1712, %v2068
    %v2121 = vmul.f32 %v1714, %v2069
    %v2122 = vmul.f32 %v1716, %v2069
    %v2123 = vmul.f32 %v1718, %v2070
    %v2124 = vmul.f32 %v1720, %v2070
    %v2125 = vmul.f32 %v1722, %v2071
    %v2126 = vmul.f32 %v1724, %v2071
    %v2127 = vmul.f32 %v1726, %v2072
    %v2128 = vmul.f32 %v1728, %v2072
    %v2129 = vmul.f32 %v1730, %v2073
    %v2130 = vmul.f32 %v1732, %v2073
    %v2131 = vmul.f32 %v1734, %v2074
    %v2132 = vmul.f32 %v1736, %v2074
    %v2133 = vmul.f32 %v1738, %v2075
    %v2134 = vmul.f32 %v1740, %v2075
    %v2135 = vmul.f32 %v1742, %v2076
    %v2136 = vmul.f32 %v1744, %v2076
    %v2137 = vmul.f32 %v1746, %v2077
    %v2138 = vmul.f32 %v1748, %v2077
    %v2139 = vmul.f32 %v1750, %v2078
    %v2140 = vmul.f32 %v1752, %v2078
    %v2141 = vmul.f32 %v1754, %v2079
    %v2142 = vmul.f32 %v1756, %v2079
    %v2143 = vmul.f32 %v1758, %v2080
    %v2144 = vmul.f32 %v1760, %v2080
    %v2145 = vld [vmem:[%s5] sm:$0xff]
    %v2147 = vsel %vm1280, %v2081, 0
    %v2150 = vsel %vm1280, %v2082, 0
    %v2153 = vsel %vm1280, %v2083, 0
    %v2156 = vsel %vm1280, %v2084, 0
    %v2159 = vsel %vm1280, %v2085, 0
    %v2162 = vsel %vm1280, %v2086, 0
    %v2165 = vsel %vm1280, %v2087, 0
    %v2168 = vsel %vm1280, %v2088, 0
    %v2171 = vsel %vm1280, %v2089, 0
    %v2174 = vsel %vm1280, %v2090, 0
    %v2177 = vsel %vm1280, %v2091, 0
    %v2180 = vsel %vm1280, %v2092, 0
    %v2183 = vsel %vm1280, %v2093, 0
    %v2186 = vsel %vm1280, %v2094, 0
    %v2189 = vsel %vm1280, %v2095, 0
    %v2192 = vsel %vm1280, %v2096, 0
    %v2195 = vsel %vm1280, %v2097, 0
    %v2198 = vsel %vm1280, %v2098, 0
    %v2201 = vsel %vm1280, %v2099, 0
    %v2204 = vsel %vm1280, %v2100, 0
    %v2207 = vsel %vm1280, %v2101, 0
    %v2210 = vsel %vm1280, %v2102, 0
    %v2213 = vsel %vm1280, %v2103, 0
    %v2216 = vsel %vm1280, %v2104, 0
    %v2219 = vsel %vm1280, %v2105, 0
    %v2222 = vsel %vm1280, %v2106, 0
    %v2225 = vsel %vm1280, %v2107, 0
    %v2228 = vsel %vm1280, %v2108, 0
    %v2231 = vsel %vm1280, %v2109, 0
    %v2234 = vsel %vm1280, %v2110, 0
    %v2237 = vsel %vm1280, %v2111, 0
    %v2240 = vsel %vm1280, %v2112, 0
    %v2243 = vsel %vm1280, %v2113, 0
    %v2246 = vsel %vm1280, %v2114, 0
    %v2249 = vsel %vm1280, %v2115, 0
    %v2252 = vsel %vm1280, %v2116, 0
    %v2255 = vsel %vm1280, %v2117, 0
    %v2258 = vsel %vm1280, %v2118, 0
    %v2261 = vsel %vm1280, %v2119, 0
    %v2264 = vsel %vm1280, %v2120, 0
    %v2267 = vsel %vm1280, %v2121, 0
    %v2270 = vsel %vm1280, %v2122, 0
    %v2273 = vsel %vm1280, %v2123, 0
    %v2276 = vsel %vm1280, %v2124, 0
    %v2279 = vsel %vm1280, %v2125, 0
    %v2282 = vsel %vm1280, %v2126, 0
    %v2285 = vsel %vm1280, %v2127, 0
    %v2288 = vsel %vm1280, %v2128, 0
    %v2291 = vsel %vm1280, %v2129, 0
    %v2294 = vsel %vm1280, %v2130, 0
    %v2297 = vsel %vm1280, %v2131, 0
    %v2300 = vsel %vm1280, %v2132, 0
    %v2303 = vsel %vm1280, %v2133, 0
    %v2306 = vsel %vm1280, %v2134, 0
    %v2309 = vsel %vm1280, %v2135, 0
    %v2312 = vsel %vm1280, %v2136, 0
    %v2315 = vsel %vm1280, %v2137, 0
    %v2318 = vsel %vm1280, %v2138, 0
    %v2321 = vsel %vm1280, %v2139, 0
    %v2324 = vsel %vm1280, %v2140, 0
    %v2327 = vsel %vm1280, %v2141, 0
    %v2330 = vsel %vm1280, %v2142, 0
    %v2333 = vsel %vm1280, %v2143, 0
    %v2336 = vsel %vm1280, %v2144, 0
    %2338 = vmatprep.subr.mxu0 0.0
    %2339 = vmatpush1.msra.mxu0 %v2145
    %2340 = vmatprep.subr.mxu0 0.0
    %2341 = vmatpush1.msra.mxu0 0.0
    %2342 = vmatprep.subr.mxu0 0.0
    %2343 = vmatpush1.msra.mxu0 0.0
    %2344 = vmatprep.subr.mxu0 0.0
    %2345 = vmatpush1.msra.mxu0 0.0
    %2346 = vmatprep.subr.mxu0 0.0
    %2347 = vmatpush1.msra.mxu0 0.0
    %2348 = vmatprep.subr.mxu0 0.0
    %2349 = vmatpush1.msra.mxu0 0.0
    %2350 = vmatprep.subr.mxu0 0.0
    %2351 = vmatpush1.msra.mxu0 0.0
    %2352 = vmatprep.subr.mxu0 0.0
    %2353 = vmatpush1.msra.mxu0 0.0
    %2354 = vmatprep.subr.mxu0 0.0
    %2355 = vmatpush1.msra.mxu0 0.0
    %2356 = vmatprep.subr.mxu0 0.0
    %2357 = vmatpush1.msra.mxu0 0.0
    %2358 = vmatprep.subr.mxu0 0.0
    %2359 = vmatpush1.msra.mxu0 0.0
    %2360 = vmatprep.subr.mxu0 0.0
    %2361 = vmatpush1.msra.mxu0 0.0
    %2362 = vmatprep.subr.mxu0 0.0
    %2363 = vmatpush1.msra.mxu0 0.0
    %2364 = vmatprep.subr.mxu0 0.0
    %2365 = vmatpush1.msra.mxu0 0.0
    %2366 = vmatprep.subr.mxu0 0.0
    %2367 = vmatpush1.msra.mxu0 0.0
    %2368 = vmatprep.subr.mxu0 0.0
    %2369 = vmatpush1.msra.mxu0 0.0
    %2370 = vmatprep.subr.mxu0 0.0
    %2371 = vmatpush1.msra.mxu0 0.0
    %2372 = vmatprep.subr.mxu0 0.0
    %2373 = vmatpush1.msra.mxu0 0.0
    %2374 = vmatprep.subr.mxu0 0.0
    %2375 = vmatpush1.msra.mxu0 0.0
    %2376 = vmatprep.subr.mxu0 0.0
    %2377 = vmatpush1.msra.mxu0 0.0
    %2378 = vmatprep.subr.mxu0 0.0
    %2379 = vmatpush1.msra.mxu0 0.0
    %2380 = vmatprep.subr.mxu0 0.0
    %2381 = vmatpush1.msra.mxu0 0.0
    %2382 = vmatprep.subr.mxu0 0.0
    %2383 = vmatpush1.msra.mxu0 0.0
    %2384 = vmatprep.subr.mxu0 0.0
    %2385 = vmatpush1.msra.mxu0 0.0
    %2386 = vmatprep.subr.mxu0 0.0
    %2387 = vmatpush1.msra.mxu0 0.0
    %2388 = vmatprep.subr.mxu0 0.0
    %2389 = vmatpush1.msra.mxu0 0.0
    %2390 = vmatprep.subr.mxu0 0.0
    %2391 = vmatpush1.msra.mxu0 0.0
    %2392 = vmatprep.subr.mxu0 0.0
    %2393 = vmatpush1.msra.mxu0 0.0
    %2394 = vmatprep.subr.mxu0 0.0
    %2395 = vmatpush1.msra.mxu0 0.0
    %2396 = vmatprep.subr.mxu0 0.0
    %2397 = vmatpush1.msra.mxu0 0.0
    %2398 = vmatprep.subr.mxu0 0.0
    %2399 = vmatpush1.msra.mxu0 0.0
    %2400 = vmatprep.subr.mxu0 0.0
    %2401 = vmatpush1.msra.mxu0 0.0
    %2402 = vmatprep.mubr.f32.mxu0 0.0
    %2403 = vmatmul.mubr.f32.gmra.mrb[0].mxu0 %v2147
    %v2404 = vpop.f32.mrb[0].mxu0
    %v2405 = vadd.f32 0.0, %v2404
    %v2406 = vpop.f32.mrb[0].mxu0
    %2407 = vmatprep.mubr.f32.mxu0 0.0
    %2408 = vmatmul.mubr.f32.gmra.mrb[0].mxu0 %v2150
    %v2409 = vpop.f32.mrb[0].mxu0
    %v2410 = vadd.f32 0.0, %v2409
    %v2411 = vpop.f32.mrb[0].mxu0
    %2412 = vmatprep.mubr.f32.mxu0 0.0
    %2413 = vmatmul.mubr.f32.gmra.mrb[0].mxu0 %v2153
    %v2414 = vpop.f32.mrb[0].mxu0
    %v2415 = vadd.f32 0.0, %v2414
    %v2416 = vpop.f32.mrb[0].mxu0
    %2417 = vmatprep.mubr.f32.mxu0 0.0
    %2418 = vmatmul.mubr.f32.gmra.mrb[0].mxu0 %v2156
    %v2419 = vpop.f32.mrb[0].mxu0
    %v2420 = vadd.f32 0.0, %v2419
    %v2421 = vpop.f32.mrb[0].mxu0
    %2422 = vmatprep.mubr.f32.mxu0 0.0
    %2423 = vmatmul.mubr.f32.gmra.mrb[0].mxu0 %v2159
    %v2424 = vpop.f32.mrb[0].mxu0
    %v2425 = vadd.f32 0.0, %v2424
    %v2426 = vpop.f32.mrb[0].mxu0
    %2427 = vmatprep.mubr.f32.mxu0 0.0
    %2428 = vmatmul.mubr.f32.gmra.mrb[0].mxu0 %v2162
    %v2429 = vpop.f32.mrb[0].mxu0
    %v2430 = vadd.f32 0.0, %v2429
    %v2431 = vpop.f32.mrb[0].mxu0
    %2432 = vmatprep.mubr.f32.mxu0 0.0
    %2433 = vmatmul.mubr.f32.gmra.mrb[0].mxu0 %v2165
    %v2434 = vpop.f32.mrb[0].mxu0
    %v2435 = vadd.f32 0.0, %v2434
    %v2436 = vpop.f32.mrb[0].mxu0
    %2437 = vmatprep.mubr.f32.mxu0 0.0
    %2438 = vmatmul.mubr.f32.gmra.mrb[0].mxu0 %v2168
    %v2439 = vpop.f32.mrb[0].mxu0
    %v2440 = vadd.f32 0.0, %v2439
    %v2441 = vpop.f32.mrb[0].mxu0
    %2442 = vmatprep.mubr.f32.mxu0 0.0
    %2443 = vmatmul.mubr.f32.gmra.mrb[0].mxu0 %v2171
    %v2444 = vpop.f32.mrb[0].mxu0
    %v2445 = vadd.f32 0.0, %v2444
    %v2446 = vpop.f32.mrb[0].mxu0
    %2447 = vmatprep.mubr.f32.mxu0 0.0
    %2448 = vmatmul.mubr.f32.gmra.mrb[0].mxu0 %v2174
    %v2449 = vpop.f32.mrb[0].mxu0
    %v2450 = vadd.f32 0.0, %v2449
    %v2451 = vpop.f32.mrb[0].mxu0
    %2452 = vmatprep.mubr.f32.mxu0 0.0
    %2453 = vmatmul.mubr.f32.gmra.mrb[0].mxu0 %v2177
    %v2454 = vpop.f32.mrb[0].mxu0
    %v2455 = vadd.f32 0.0, %v2454
    %v2456 = vpop.f32.mrb[0].mxu0
    %2457 = vmatprep.mubr.f32.mxu0 0.0
    %2458 = vmatmul.mubr.f32.gmra.mrb[0].mxu0 %v2180
    %v2459 = vpop.f32.mrb[0].mxu0
    %v2460 = vadd.f32 0.0, %v2459
    %v2461 = vpop.f32.mrb[0].mxu0
    %2462 = vmatprep.mubr.f32.mxu0 0.0
    %2463 = vmatmul.mubr.f32.gmra.mrb[0].mxu0 %v2183
    %v2464 = vpop.f32.mrb[0].mxu0
    %v2465 = vadd.f32 0.0, %v2464
    %v2466 = vpop.f32.mrb[0].mxu0
    %2467 = vmatprep.mubr.f32.mxu0 0.0
    %2468 = vmatmul.mubr.f32.gmra.mrb[0].mxu0 %v2186
    %v2469 = vpop.f32.mrb[0].mxu0
    %v2470 = vadd.f32 0.0, %v2469
    %v2471 = vpop.f32.mrb[0].mxu0
    %2472 = vmatprep.mubr.f32.mxu0 0.0
    %2473 = vmatmul.mubr.f32.gmra.mrb[0].mxu0 %v2189
    %v2474 = vpop.f32.mrb[0].mxu0
    %v2475 = vadd.f32 0.0, %v2474
    %v2476 = vpop.f32.mrb[0].mxu0
    %2477 = vmatprep.mubr.f32.mxu0 0.0
    %2478 = vmatmul.mubr.f32.gmra.mrb[0].mxu0 %v2192
    %v2479 = vpop.f32.mrb[0].mxu0
    %v2480 = vadd.f32 0.0, %v2479
    %v2481 = vpop.f32.mrb[0].mxu0
    %2482 = vmatprep.mubr.f32.mxu0 0.0
    %2483 = vmatmul.mubr.f32.gmra.mrb[0].mxu0 %v2195
    %v2484 = vpop.f32.mrb[0].mxu0
    %v2485 = vadd.f32 0.0, %v2484
    %v2486 = vpop.f32.mrb[0].mxu0
    %2487 = vmatprep.mubr.f32.mxu0 0.0
    %2488 = vmatmul.mubr.f32.gmra.mrb[0].mxu0 %v2198
    %v2489 = vpop.f32.mrb[0].mxu0
    %v2490 = vadd.f32 0.0, %v2489
    %v2491 = vpop.f32.mrb[0].mxu0
    %2492 = vmatprep.mubr.f32.mxu0 0.0
    %2493 = vmatmul.mubr.f32.gmra.mrb[0].mxu0 %v2201
    %v2494 = vpop.f32.mrb[0].mxu0
    %v2495 = vadd.f32 0.0, %v2494
    %v2496 = vpop.f32.mrb[0].mxu0
    %2497 = vmatprep.mubr.f32.mxu0 0.0
    %2498 = vmatmul.mubr.f32.gmra.mrb[0].mxu0 %v2204
    %v2499 = vpop.f32.mrb[0].mxu0
    %v2500 = vadd.f32 0.0, %v2499
    %v2501 = vpop.f32.mrb[0].mxu0
    %2502 = vmatprep.mubr.f32.mxu0 0.0
    %2503 = vmatmul.mubr.f32.gmra.mrb[0].mxu0 %v2207
    %v2504 = vpop.f32.mrb[0].mxu0
    %v2505 = vadd.f32 0.0, %v2504
    %v2506 = vpop.f32.mrb[0].mxu0
    %2507 = vmatprep.mubr.f32.mxu0 0.0
    %2508 = vmatmul.mubr.f32.gmra.mrb[0].mxu0 %v2210
    %v2509 = vpop.f32.mrb[0].mxu0
    %v2510 = vadd.f32 0.0, %v2509
    %v2511 = vpop.f32.mrb[0].mxu0
    %2512 = vmatprep.mubr.f32.mxu0 0.0
    %2513 = vmatmul.mubr.f32.gmra.mrb[0].mxu0 %v2213
    %v2514 = vpop.f32.mrb[0].mxu0
    %v2515 = vadd.f32 0.0, %v2514
    %v2516 = vpop.f32.mrb[0].mxu0
    %2517 = vmatprep.mubr.f32.mxu0 0.0
    %2518 = vmatmul.mubr.f32.gmra.mrb[0].mxu0 %v2216
    %v2519 = vpop.f32.mrb[0].mxu0
    %v2520 = vadd.f32 0.0, %v2519
    %v2521 = vpop.f32.mrb[0].mxu0
    %2522 = vmatprep.mubr.f32.mxu0 0.0
    %2523 = vmatmul.mubr.f32.gmra.mrb[0].mxu0 %v2219
    %v2524 = vpop.f32.mrb[0].mxu0
    %v2525 = vadd.f32 0.0, %v2524
    %v2526 = vpop.f32.mrb[0].mxu0
    %2527 = vmatprep.mubr.f32.mxu0 0.0
    %2528 = vmatmul.mubr.f32.gmra.mrb[0].mxu0 %v2222
    %v2529 = vpop.f32.mrb[0].mxu0
    %v2530 = vadd.f32 0.0, %v2529
    %v2531 = vpop.f32.mrb[0].mxu0
    %2532 = vmatprep.mubr.f32.mxu0 0.0
    %2533 = vmatmul.mubr.f32.gmra.mrb[0].mxu0 %v2225
    %v2534 = vpop.f32.mrb[0].mxu0
    %v2535 = vadd.f32 0.0, %v2534
    %v2536 = vpop.f32.mrb[0].mxu0
    %2537 = vmatprep.mubr.f32.mxu0 0.0
    %2538 = vmatmul.mubr.f32.gmra.mrb[0].mxu0 %v2228
    %v2539 = vpop.f32.mrb[0].mxu0
    %v2540 = vadd.f32 0.0, %v2539
    %v2541 = vpop.f32.mrb[0].mxu0
    %2542 = vmatprep.mubr.f32.mxu0 0.0
    %2543 = vmatmul.mubr.f32.gmra.mrb[0].mxu0 %v2231
    %v2544 = vpop.f32.mrb[0].mxu0
    %v2545 = vadd.f32 0.0, %v2544
    %v2546 = vpop.f32.mrb[0].mxu0
    %2547 = vmatprep.mubr.f32.mxu0 0.0
    %2548 = vmatmul.mubr.f32.gmra.mrb[0].mxu0 %v2234
    %v2549 = vpop.f32.mrb[0].mxu0
    %v2550 = vadd.f32 0.0, %v2549
    %v2551 = vpop.f32.mrb[0].mxu0
    %2552 = vmatprep.mubr.f32.mxu0 0.0
    %2553 = vmatmul.mubr.f32.gmra.mrb[0].mxu0 %v2237
    %v2554 = vpop.f32.mrb[0].mxu0
    %v2555 = vadd.f32 0.0, %v2554
    %v2556 = vpop.f32.mrb[0].mxu0
    %2557 = vmatprep.mubr.f32.mxu0 0.0
    %2558 = vmatmul.mubr.f32.gmra.mrb[0].mxu0 %v2240
    %v2559 = vpop.f32.mrb[0].mxu0
    %v2560 = vadd.f32 0.0, %v2559
    %v2561 = vpop.f32.mrb[0].mxu0
    %2562 = vmatprep.mubr.f32.mxu0 0.0
    %2563 = vmatmul.mubr.f32.gmra.mrb[0].mxu0 %v2243
    %v2564 = vpop.f32.mrb[0].mxu0
    %v2565 = vadd.f32 0.0, %v2564
    %v2566 = vpop.f32.mrb[0].mxu0
    %2567 = vmatprep.mubr.f32.mxu0 0.0
    %2568 = vmatmul.mubr.f32.gmra.mrb[0].mxu0 %v2246
    %v2569 = vpop.f32.mrb[0].mxu0
    %v2570 = vadd.f32 0.0, %v2569
    %v2571 = vpop.f32.mrb[0].mxu0
    %2572 = vmatprep.mubr.f32.mxu0 0.0
    %2573 = vmatmul.mubr.f32.gmra.mrb[0].mxu0 %v2249
    %v2574 = vpop.f32.mrb[0].mxu0
    %v2575 = vadd.f32 0.0, %v2574
    %v2576 = vpop.f32.mrb[0].mxu0
    %2577 = vmatprep.mubr.f32.mxu0 0.0
    %2578 = vmatmul.mubr.f32.gmra.mrb[0].mxu0 %v2252
    %v2579 = vpop.f32.mrb[0].mxu0
    %v2580 = vadd.f32 0.0, %v2579
    %v2581 = vpop.f32.mrb[0].mxu0
    %2582 = vmatprep.mubr.f32.mxu0 0.0
    %2583 = vmatmul.mubr.f32.gmra.mrb[0].mxu0 %v2255
    %v2584 = vpop.f32.mrb[0].mxu0
    %v2585 = vadd.f32 0.0, %v2584
    %v2586 = vpop.f32.mrb[0].mxu0
    %2587 = vmatprep.mubr.f32.mxu0 0.0
    %2588 = vmatmul.mubr.f32.gmra.mrb[0].mxu0 %v2258
    %v2589 = vpop.f32.mrb[0].mxu0
    %v2590 = vadd.f32 0.0, %v2589
    %v2591 = vpop.f32.mrb[0].mxu0
    %2592 = vmatprep.mubr.f32.mxu0 0.0
    %2593 = vmatmul.mubr.f32.gmra.mrb[0].mxu0 %v2261
    %v2594 = vpop.f32.mrb[0].mxu0
    %v2595 = vadd.f32 0.0, %v2594
    %v2596 = vpop.f32.mrb[0].mxu0
    %2597 = vmatprep.mubr.f32.mxu0 0.0
    %2598 = vmatmul.mubr.f32.gmra.mrb[0].mxu0 %v2264
    %v2599 = vpop.f32.mrb[0].mxu0
    %v2600 = vadd.f32 0.0, %v2599
    %v2601 = vpop.f32.mrb[0].mxu0
    %2602 = vmatprep.mubr.f32.mxu0 0.0
    %2603 = vmatmul.mubr.f32.gmra.mrb[0].mxu0 %v2267
    %v2604 = vpop.f32.mrb[0].mxu0
    %v2605 = vadd.f32 0.0, %v2604
    %v2606 = vpop.f32.mrb[0].mxu0
    %2607 = vmatprep.mubr.f32.mxu0 0.0
    %2608 = vmatmul.mubr.f32.gmra.mrb[0].mxu0 %v2270
    %v2609 = vpop.f32.mrb[0].mxu0
    %v2610 = vadd.f32 0.0, %v2609
    %v2611 = vpop.f32.mrb[0].mxu0
    %2612 = vmatprep.mubr.f32.mxu0 0.0
    %2613 = vmatmul.mubr.f32.gmra.mrb[0].mxu0 %v2273
    %v2614 = vpop.f32.mrb[0].mxu0
    %v2615 = vadd.f32 0.0, %v2614
    %v2616 = vpop.f32.mrb[0].mxu0
    %2617 = vmatprep.mubr.f32.mxu0 0.0
    %2618 = vmatmul.mubr.f32.gmra.mrb[0].mxu0 %v2276
    %v2619 = vpop.f32.mrb[0].mxu0
    %v2620 = vadd.f32 0.0, %v2619
    %v2621 = vpop.f32.mrb[0].mxu0
    %2622 = vmatprep.mubr.f32.mxu0 0.0
    %2623 = vmatmul.mubr.f32.gmra.mrb[0].mxu0 %v2279
    %v2624 = vpop.f32.mrb[0].mxu0
    %v2625 = vadd.f32 0.0, %v2624
    %v2626 = vpop.f32.mrb[0].mxu0
    %2627 = vmatprep.mubr.f32.mxu0 0.0
    %2628 = vmatmul.mubr.f32.gmra.mrb[0].mxu0 %v2282
    %v2629 = vpop.f32.mrb[0].mxu0
    %v2630 = vadd.f32 0.0, %v2629
    %v2631 = vpop.f32.mrb[0].mxu0
    %2632 = vmatprep.mubr.f32.mxu0 0.0
    %2633 = vmatmul.mubr.f32.gmra.mrb[0].mxu0 %v2285
    %v2634 = vpop.f32.mrb[0].mxu0
    %v2635 = vadd.f32 0.0, %v2634
    %v2636 = vpop.f32.mrb[0].mxu0
    %2637 = vmatprep.mubr.f32.mxu0 0.0
    %2638 = vmatmul.mubr.f32.gmra.mrb[0].mxu0 %v2288
    %v2639 = vpop.f32.mrb[0].mxu0
    %v2640 = vadd.f32 0.0, %v2639
    %v2641 = vpop.f32.mrb[0].mxu0
    %2642 = vmatprep.mubr.f32.mxu0 0.0
    %2643 = vmatmul.mubr.f32.gmra.mrb[0].mxu0 %v2291
    %v2644 = vpop.f32.mrb[0].mxu0
    %v2645 = vadd.f32 0.0, %v2644
    %v2646 = vpop.f32.mrb[0].mxu0
    %2647 = vmatprep.mubr.f32.mxu0 0.0
    %2648 = vmatmul.mubr.f32.gmra.mrb[0].mxu0 %v2294
    %v2649 = vpop.f32.mrb[0].mxu0
    %v2650 = vadd.f32 0.0, %v2649
    %v2651 = vpop.f32.mrb[0].mxu0
    %2652 = vmatprep.mubr.f32.mxu0 0.0
    %2653 = vmatmul.mubr.f32.gmra.mrb[0].mxu0 %v2297
    %v2654 = vpop.f32.mrb[0].mxu0
    %v2655 = vadd.f32 0.0, %v2654
    %v2656 = vpop.f32.mrb[0].mxu0
    %2657 = vmatprep.mubr.f32.mxu0 0.0
    %2658 = vmatmul.mubr.f32.gmra.mrb[0].mxu0 %v2300
    %v2659 = vpop.f32.mrb[0].mxu0
    %v2660 = vadd.f32 0.0, %v2659
    %v2661 = vpop.f32.mrb[0].mxu0
    %2662 = vmatprep.mubr.f32.mxu0 0.0
    %2663 = vmatmul.mubr.f32.gmra.mrb[0].mxu0 %v2303
    %v2664 = vpop.f32.mrb[0].mxu0
    %v2665 = vadd.f32 0.0, %v2664
    %v2666 = vpop.f32.mrb[0].mxu0
    %2667 = vmatprep.mubr.f32.mxu0 0.0
    %2668 = vmatmul.mubr.f32.gmra.mrb[0].mxu0 %v2306
    %v2669 = vpop.f32.mrb[0].mxu0
    %v2670 = vadd.f32 0.0, %v2669
    %v2671 = vpop.f32.mrb[0].mxu0
    %2672 = vmatprep.mubr.f32.mxu0 0.0
    %2673 = vmatmul.mubr.f32.gmra.mrb[0].mxu0 %v2309
    %v2674 = vpop.f32.mrb[0].mxu0
    %v2675 = vadd.f32 0.0, %v2674
    %v2676 = vpop.f32.mrb[0].mxu0
    %2677 = vmatprep.mubr.f32.mxu0 0.0
    %2678 = vmatmul.mubr.f32.gmra.mrb[0].mxu0 %v2312
    %v2679 = vpop.f32.mrb[0].mxu0
    %v2680 = vadd.f32 0.0, %v2679
    %v2681 = vpop.f32.mrb[0].mxu0
    %2682 = vmatprep.mubr.f32.mxu0 0.0
    %2683 = vmatmul.mubr.f32.gmra.mrb[0].mxu0 %v2315
    %v2684 = vpop.f32.mrb[0].mxu0
    %v2685 = vadd.f32 0.0, %v2684
    %v2686 = vpop.f32.mrb[0].mxu0
    %2687 = vmatprep.mubr.f32.mxu0 0.0
    %2688 = vmatmul.mubr.f32.gmra.mrb[0].mxu0 %v2318
    %v2689 = vpop.f32.mrb[0].mxu0
    %v2690 = vadd.f32 0.0, %v2689
    %v2691 = vpop.f32.mrb[0].mxu0
    %2692 = vmatprep.mubr.f32.mxu0 0.0
    %2693 = vmatmul.mubr.f32.gmra.mrb[0].mxu0 %v2321
    %v2694 = vpop.f32.mrb[0].mxu0
    %v2695 = vadd.f32 0.0, %v2694
    %v2696 = vpop.f32.mrb[0].mxu0
    %2697 = vmatprep.mubr.f32.mxu0 0.0
    %2698 = vmatmul.mubr.f32.gmra.mrb[0].mxu0 %v2324
    %v2699 = vpop.f32.mrb[0].mxu0
    %v2700 = vadd.f32 0.0, %v2699
    %v2701 = vpop.f32.mrb[0].mxu0
    %2702 = vmatprep.mubr.f32.mxu0 0.0
    %2703 = vmatmul.mubr.f32.gmra.mrb[0].mxu0 %v2327
    %v2704 = vpop.f32.mrb[0].mxu0
    %v2705 = vadd.f32 0.0, %v2704
    %v2706 = vpop.f32.mrb[0].mxu0
    %2707 = vmatprep.mubr.f32.mxu0 0.0
    %2708 = vmatmul.mubr.f32.gmra.mrb[0].mxu0 %v2330
    %v2709 = vpop.f32.mrb[0].mxu0
    %v2710 = vadd.f32 0.0, %v2709
    %v2711 = vpop.f32.mrb[0].mxu0
    %2712 = vmatprep.mubr.f32.mxu0 0.0
    %2713 = vmatmul.mubr.f32.gmra.mrb[0].mxu0 %v2333
    %v2714 = vpop.f32.mrb[0].mxu0
    %v2715 = vadd.f32 0.0, %v2714
    %v2716 = vpop.f32.mrb[0].mxu0
    %2717 = vmatprep.mubr.f32.mxu0 0.0
    %2718 = vmatmul.mubr.f32.gmra.mrb[0].mxu0 %v2336
    %v2719 = vpop.f32.mrb[0].mxu0
    %v2720 = vadd.f32 0.0, %v2719
    %v2721 = vpop.f32.mrb[0].mxu0
    %2722 = vdwg.mxu0
    %v2723 = vmul.f32 %v2405, %v261
    %v2724 = vmul.f32 %v2410, %v264
    %v2725 = vmul.f32 %v2415, %v261
    %v2726 = vmul.f32 %v2420, %v264
    %v2727 = vmul.f32 %v2425, %v261
    %v2728 = vmul.f32 %v2430, %v264
    %v2729 = vmul.f32 %v2435, %v261
    %v2730 = vmul.f32 %v2440, %v264
    %v2731 = vmul.f32 %v2445, %v261
    %v2732 = vmul.f32 %v2450, %v264
    %v2733 = vmul.f32 %v2455, %v261
    %v2734 = vmul.f32 %v2460, %v264
    %v2735 = vmul.f32 %v2465, %v261
    %v2736 = vmul.f32 %v2470, %v264
    %v2737 = vmul.f32 %v2475, %v261
    %v2738 = vmul.f32 %v2480, %v264
    %v2739 = vmul.f32 %v2485, %v261
    %v2740 = vmul.f32 %v2490, %v264
    %v2741 = vmul.f32 %v2495, %v261
    %v2742 = vmul.f32 %v2500, %v264
    %v2743 = vmul.f32 %v2505, %v261
    %v2744 = vmul.f32 %v2510, %v264
    %v2745 = vmul.f32 %v2515, %v261
    %v2746 = vmul.f32 %v2520, %v264
    %v2747 = vmul.f32 %v2525, %v261
    %v2748 = vmul.f32 %v2530, %v264
    %v2749 = vmul.f32 %v2535, %v261
    %v2750 = vmul.f32 %v2540, %v264
    %v2751 = vmul.f32 %v2545, %v261
    %v2752 = vmul.f32 %v2550, %v264
    %v2753 = vmul.f32 %v2555, %v261
    %v2754 = vmul.f32 %v2560, %v264
    %v2755 = vmul.f32 %v2565, %v269
    %v2756 = vmul.f32 %v2570, %v272
    %v2757 = vmul.f32 %v2575, %v269
    %v2758 = vmul.f32 %v2580, %v272
    %v2759 = vmul.f32 %v2585, %v269
    %v2760 = vmul.f32 %v2590, %v272
    %v2761 = vmul.f32 %v2595, %v269
    %v2762 = vmul.f32 %v2600, %v272
    %v2763 = vmul.f32 %v2605, %v269
    %v2764 = vmul.f32 %v2610, %v272
    %v2765 = vmul.f32 %v2615, %v269
    %v2766 = vmul.f32 %v2620, %v272
    %v2767 = vmul.f32 %v2625, %v269
    %v2768 = vmul.f32 %v2630, %v272
    %v2769 = vmul.f32 %v2635, %v269
    %v2770 = vmul.f32 %v2640, %v272
    %v2771 = vmul.f32 %v2645, %v269
    %v2772 = vmul.f32 %v2650, %v272
    %v2773 = vmul.f32 %v2655, %v269
    %v2774 = vmul.f32 %v2660, %v272
    %v2775 = vmul.f32 %v2665, %v269
    %v2776 = vmul.f32 %v2670, %v272
    %v2777 = vmul.f32 %v2675, %v269
    %v2778 = vmul.f32 %v2680, %v272
    %v2779 = vmul.f32 %v2685, %v269
    %v2780 = vmul.f32 %v2690, %v272
    %v2781 = vmul.f32 %v2695, %v269
    %v2782 = vmul.f32 %v2700, %v272
    %v2783 = vmul.f32 %v2705, %v269
    %v2784 = vmul.f32 %v2710, %v272
    %v2785 = vmul.f32 %v2715, %v269
    %v2786 = vmul.f32 %v2720, %v272
    %v2787 = vsel %vm89, %v2723, 0.0
    %v2788 = vsel %vm89, %v2724, 0.0
    %v2789 = vadd.f32 %v2787, %v2788
    %v2790 = vrot.slane %v2789, 4
    %v2791 = vadd.f32 %v2789, %v2790
    %v2792 = vrot.slane %v2791, 2
    %v2793 = vadd.f32 %v2791, %v2792
    %v2794 = vrot.slane %v2793, 1
    %v2795 = vadd.f32 %v2793, %v2794
    %v2796 = vsel %vm89, %v2725, 0.0
    %v2797 = vsel %vm89, %v2726, 0.0
    %v2798 = vadd.f32 %v2796, %v2797
    %v2799 = vrot.slane %v2798, 4
    %v2800 = vadd.f32 %v2798, %v2799
    %v2801 = vrot.slane %v2800, 2
    %v2802 = vadd.f32 %v2800, %v2801
    %v2803 = vrot.slane %v2802, 1
    %v2804 = vadd.f32 %v2802, %v2803
    %v2805 = vsel %vm89, %v2727, 0.0
    %v2806 = vsel %vm89, %v2728, 0.0
    %v2807 = vadd.f32 %v2805, %v2806
    %v2808 = vrot.slane %v2807, 4
    %v2809 = vadd.f32 %v2807, %v2808
    %v2810 = vrot.slane %v2809, 2
    %v2811 = vadd.f32 %v2809, %v2810
    %v2812 = vrot.slane %v2811, 1
    %v2813 = vadd.f32 %v2811, %v2812
    %v2814 = vsel %vm89, %v2729, 0.0
    %v2815 = vsel %vm89, %v2730, 0.0
    %v2816 = vadd.f32 %v2814, %v2815
    %v2817 = vrot.slane %v2816, 4
    %v2818 = vadd.f32 %v2816, %v2817
    %v2819 = vrot.slane %v2818, 2
    %v2820 = vadd.f32 %v2818, %v2819
    %v2821 = vrot.slane %v2820, 1
    %v2822 = vadd.f32 %v2820, %v2821
    %v2823 = vsel %vm89, %v2731, 0.0
    %v2824 = vsel %vm89, %v2732, 0.0
    %v2825 = vadd.f32 %v2823, %v2824
    %v2826 = vrot.slane %v2825, 4
    %v2827 = vadd.f32 %v2825, %v2826
    %v2828 = vrot.slane %v2827, 2
    %v2829 = vadd.f32 %v2827, %v2828
    %v2830 = vrot.slane %v2829, 1
    %v2831 = vadd.f32 %v2829, %v2830
    %v2832 = vsel %vm89, %v2733, 0.0
    %v2833 = vsel %vm89, %v2734, 0.0
    %v2834 = vadd.f32 %v2832, %v2833
    %v2835 = vrot.slane %v2834, 4
    %v2836 = vadd.f32 %v2834, %v2835
    %v2837 = vrot.slane %v2836, 2
    %v2838 = vadd.f32 %v2836, %v2837
    %v2839 = vrot.slane %v2838, 1
    %v2840 = vadd.f32 %v2838, %v2839
    %v2841 = vsel %vm89, %v2735, 0.0
    %v2842 = vsel %vm89, %v2736, 0.0
    %v2843 = vadd.f32 %v2841, %v2842
    %v2844 = vrot.slane %v2843, 4
    %v2845 = vadd.f32 %v2843, %v2844
    %v2846 = vrot.slane %v2845, 2
    %v2847 = vadd.f32 %v2845, %v2846
    %v2848 = vrot.slane %v2847, 1
    %v2849 = vadd.f32 %v2847, %v2848
    %v2850 = vsel %vm89, %v2737, 0.0
    %v2851 = vsel %vm89, %v2738, 0.0
    %v2852 = vadd.f32 %v2850, %v2851
    %v2853 = vrot.slane %v2852, 4
    %v2854 = vadd.f32 %v2852, %v2853
    %v2855 = vrot.slane %v2854, 2
    %v2856 = vadd.f32 %v2854, %v2855
    %v2857 = vrot.slane %v2856, 1
    %v2858 = vadd.f32 %v2856, %v2857
    %v2859 = vsel %vm89, %v2739, 0.0
    %v2860 = vsel %vm89, %v2740, 0.0
    %v2861 = vadd.f32 %v2859, %v2860
    %v2862 = vrot.slane %v2861, 4
    %v2863 = vadd.f32 %v2861, %v2862
    %v2864 = vrot.slane %v2863, 2
    %v2865 = vadd.f32 %v2863, %v2864
    %v2866 = vrot.slane %v2865, 1
    %v2867 = vadd.f32 %v2865, %v2866
    %v2868 = vsel %vm89, %v2741, 0.0
    %v2869 = vsel %vm89, %v2742, 0.0
    %v2870 = vadd.f32 %v2868, %v2869
    %v2871 = vrot.slane %v2870, 4
    %v2872 = vadd.f32 %v2870, %v2871
    %v2873 = vrot.slane %v2872, 2
    %v2874 = vadd.f32 %v2872, %v2873
    %v2875 = vrot.slane %v2874, 1
    %v2876 = vadd.f32 %v2874, %v2875
    %v2877 = vsel %vm89, %v2743, 0.0
    %v2878 = vsel %vm89, %v2744, 0.0
    %v2879 = vadd.f32 %v2877, %v2878
    %v2880 = vrot.slane %v2879, 4
    %v2881 = vadd.f32 %v2879, %v2880
    %v2882 = vrot.slane %v2881, 2
    %v2883 = vadd.f32 %v2881, %v2882
    %v2884 = vrot.slane %v2883, 1
    %v2885 = vadd.f32 %v2883, %v2884
    %v2886 = vsel %vm89, %v2745, 0.0
    %v2887 = vsel %vm89, %v2746, 0.0
    %v2888 = vadd.f32 %v2886, %v2887
    %v2889 = vrot.slane %v2888, 4
    %v2890 = vadd.f32 %v2888, %v2889
    %v2891 = vrot.slane %v2890, 2
    %v2892 = vadd.f32 %v2890, %v2891
    %v2893 = vrot.slane %v2892, 1
    %v2894 = vadd.f32 %v2892, %v2893
    %v2895 = vsel %vm89, %v2747, 0.0
    %v2896 = vsel %vm89, %v2748, 0.0
    %v2897 = vadd.f32 %v2895, %v2896
    %v2898 = vrot.slane %v2897, 4
    %v2899 = vadd.f32 %v2897, %v2898
    %v2900 = vrot.slane %v2899, 2
    %v2901 = vadd.f32 %v2899, %v2900
    %v2902 = vrot.slane %v2901, 1
    %v2903 = vadd.f32 %v2901, %v2902
    %v2904 = vsel %vm89, %v2749, 0.0
    %v2905 = vsel %vm89, %v2750, 0.0
    %v2906 = vadd.f32 %v2904, %v2905
    %v2907 = vrot.slane %v2906, 4
    %v2908 = vadd.f32 %v2906, %v2907
    %v2909 = vrot.slane %v2908, 2
    %v2910 = vadd.f32 %v2908, %v2909
    %v2911 = vrot.slane %v2910, 1
    %v2912 = vadd.f32 %v2910, %v2911
    %v2913 = vsel %vm89, %v2751, 0.0
    %v2914 = vsel %vm89, %v2752, 0.0
    %v2915 = vadd.f32 %v2913, %v2914
    %v2916 = vrot.slane %v2915, 4
    %v2917 = vadd.f32 %v2915, %v2916
    %v2918 = vrot.slane %v2917, 2
    %v2919 = vadd.f32 %v2917, %v2918
    %v2920 = vrot.slane %v2919, 1
    %v2921 = vadd.f32 %v2919, %v2920
    %v2922 = vsel %vm89, %v2753, 0.0
    %v2923 = vsel %vm89, %v2754, 0.0
    %v2924 = vadd.f32 %v2922, %v2923
    %v2925 = vrot.slane %v2924, 4
    %v2926 = vadd.f32 %v2924, %v2925
    %v2927 = vrot.slane %v2926, 2
    %v2928 = vadd.f32 %v2926, %v2927
    %v2929 = vrot.slane %v2928, 1
    %v2930 = vadd.f32 %v2928, %v2929
    %v2931 = vsel %vm89, %v2755, 0.0
    %v2932 = vsel %vm89, %v2756, 0.0
    %v2933 = vadd.f32 %v2931, %v2932
    %v2934 = vrot.slane %v2933, 4
    %v2935 = vadd.f32 %v2933, %v2934
    %v2936 = vrot.slane %v2935, 2
    %v2937 = vadd.f32 %v2935, %v2936
    %v2938 = vrot.slane %v2937, 1
    %v2939 = vadd.f32 %v2937, %v2938
    %v2940 = vsel %vm89, %v2757, 0.0
    %v2941 = vsel %vm89, %v2758, 0.0
    %v2942 = vadd.f32 %v2940, %v2941
    %v2943 = vrot.slane %v2942, 4
    %v2944 = vadd.f32 %v2942, %v2943
    %v2945 = vrot.slane %v2944, 2
    %v2946 = vadd.f32 %v2944, %v2945
    %v2947 = vrot.slane %v2946, 1
    %v2948 = vadd.f32 %v2946, %v2947
    %v2949 = vsel %vm89, %v2759, 0.0
    %v2950 = vsel %vm89, %v2760, 0.0
    %v2951 = vadd.f32 %v2949, %v2950
    %v2952 = vrot.slane %v2951, 4
    %v2953 = vadd.f32 %v2951, %v2952
    %v2954 = vrot.slane %v2953, 2
    %v2955 = vadd.f32 %v2953, %v2954
    %v2956 = vrot.slane %v2955, 1
    %v2957 = vadd.f32 %v2955, %v2956
    %v2958 = vsel %vm89, %v2761, 0.0
    %v2959 = vsel %vm89, %v2762, 0.0
    %v2960 = vadd.f32 %v2958, %v2959
    %v2961 = vrot.slane %v2960, 4
    %v2962 = vadd.f32 %v2960, %v2961
    %v2963 = vrot.slane %v2962, 2
    %v2964 = vadd.f32 %v2962, %v2963
    %v2965 = vrot.slane %v2964, 1
    %v2966 = vadd.f32 %v2964, %v2965
    %v2967 = vsel %vm89, %v2763, 0.0
    %v2968 = vsel %vm89, %v2764, 0.0
    %v2969 = vadd.f32 %v2967, %v2968
    %v2970 = vrot.slane %v2969, 4
    %v2971 = vadd.f32 %v2969, %v2970
    %v2972 = vrot.slane %v2971, 2
    %v2973 = vadd.f32 %v2971, %v2972
    %v2974 = vrot.slane %v2973, 1
    %v2975 = vadd.f32 %v2973, %v2974
    %v2976 = vsel %vm89, %v2765, 0.0
    %v2977 = vsel %vm89, %v2766, 0.0
    %v2978 = vadd.f32 %v2976, %v2977
    %v2979 = vrot.slane %v2978, 4
    %v2980 = vadd.f32 %v2978, %v2979
    %v2981 = vrot.slane %v2980, 2
    %v2982 = vadd.f32 %v2980, %v2981
    %v2983 = vrot.slane %v2982, 1
    %v2984 = vadd.f32 %v2982, %v2983
    %v2985 = vsel %vm89, %v2767, 0.0
    %v2986 = vsel %vm89, %v2768, 0.0
    %v2987 = vadd.f32 %v2985, %v2986
    %v2988 = vrot.slane %v2987, 4
    %v2989 = vadd.f32 %v2987, %v2988
    %v2990 = vrot.slane %v2989, 2
    %v2991 = vadd.f32 %v2989, %v2990
    %v2992 = vrot.slane %v2991, 1
    %v2993 = vadd.f32 %v2991, %v2992
    %v2994 = vsel %vm89, %v2769, 0.0
    %v2995 = vsel %vm89, %v2770, 0.0
    %v2996 = vadd.f32 %v2994, %v2995
    %v2997 = vrot.slane %v2996, 4
    %v2998 = vadd.f32 %v2996, %v2997
    %v2999 = vrot.slane %v2998, 2
    %v3000 = vadd.f32 %v2998, %v2999
    %v3001 = vrot.slane %v3000, 1
    %v3002 = vadd.f32 %v3000, %v3001
    %v3003 = vsel %vm89, %v2771, 0.0
    %v3004 = vsel %vm89, %v2772, 0.0
    %v3005 = vadd.f32 %v3003, %v3004
    %v3006 = vrot.slane %v3005, 4
    %v3007 = vadd.f32 %v3005, %v3006
    %v3008 = vrot.slane %v3007, 2
    %v3009 = vadd.f32 %v3007, %v3008
    %v3010 = vrot.slane %v3009, 1
    %v3011 = vadd.f32 %v3009, %v3010
    %v3012 = vsel %vm89, %v2773, 0.0
    %v3013 = vsel %vm89, %v2774, 0.0
    %v3014 = vadd.f32 %v3012, %v3013
    %v3015 = vrot.slane %v3014, 4
    %v3016 = vadd.f32 %v3014, %v3015
    %v3017 = vrot.slane %v3016, 2
    %v3018 = vadd.f32 %v3016, %v3017
    %v3019 = vrot.slane %v3018, 1
    %v3020 = vadd.f32 %v3018, %v3019
    %v3021 = vsel %vm89, %v2775, 0.0
    %v3022 = vsel %vm89, %v2776, 0.0
    %v3023 = vadd.f32 %v3021, %v3022
    %v3024 = vrot.slane %v3023, 4
    %v3025 = vadd.f32 %v3023, %v3024
    %v3026 = vrot.slane %v3025, 2
    %v3027 = vadd.f32 %v3025, %v3026
    %v3028 = vrot.slane %v3027, 1
    %v3029 = vadd.f32 %v3027, %v3028
    %v3030 = vsel %vm89, %v2777, 0.0
    %v3031 = vsel %vm89, %v2778, 0.0
    %v3032 = vadd.f32 %v3030, %v3031
    %v3033 = vrot.slane %v3032, 4
    %v3034 = vadd.f32 %v3032, %v3033
    %v3035 = vrot.slane %v3034, 2
    %v3036 = vadd.f32 %v3034, %v3035
    %v3037 = vrot.slane %v3036, 1
    %v3038 = vadd.f32 %v3036, %v3037
    %v3039 = vsel %vm89, %v2779, 0.0
    %v3040 = vsel %vm89, %v2780, 0.0
    %v3041 = vadd.f32 %v3039, %v3040
    %v3042 = vrot.slane %v3041, 4
    %v3043 = vadd.f32 %v3041, %v3042
    %v3044 = vrot.slane %v3043, 2
    %v3045 = vadd.f32 %v3043, %v3044
    %v3046 = vrot.slane %v3045, 1
    %v3047 = vadd.f32 %v3045, %v3046
    %v3048 = vsel %vm89, %v2781, 0.0
    %v3049 = vsel %vm89, %v2782, 0.0
    %v3050 = vadd.f32 %v3048, %v3049
    %v3051 = vrot.slane %v3050, 4
    %v3052 = vadd.f32 %v3050, %v3051
    %v3053 = vrot.slane %v3052, 2
    %v3054 = vadd.f32 %v3052, %v3053
    %v3055 = vrot.slane %v3054, 1
    %v3056 = vadd.f32 %v3054, %v3055
    %v3057 = vsel %vm89, %v2783, 0.0
    %v3058 = vsel %vm89, %v2784, 0.0
    %v3059 = vadd.f32 %v3057, %v3058
    %v3060 = vrot.slane %v3059, 4
    %v3061 = vadd.f32 %v3059, %v3060
    %v3062 = vrot.slane %v3061, 2
    %v3063 = vadd.f32 %v3061, %v3062
    %v3064 = vrot.slane %v3063, 1
    %v3065 = vadd.f32 %v3063, %v3064
    %v3066 = vsel %vm89, %v2785, 0.0
    %v3067 = vsel %vm89, %v2786, 0.0
    %v3068 = vadd.f32 %v3066, %v3067
    %v3069 = vrot.slane %v3068, 4
    %v3070 = vadd.f32 %v3068, %v3069
    %v3071 = vrot.slane %v3070, 2
    %v3072 = vadd.f32 %v3070, %v3071
    %v3073 = vrot.slane %v3072, 1
    %v3074 = vadd.f32 %v3072, %v3073
    %v3075 = vpack.c.bf16 %v2795, %v2795
    %v3076 = vpack.c.bf16 %v2804, %v2804
    %v3077 = vpack.c.bf16 %v2813, %v2813
    %v3078 = vpack.c.bf16 %v2822, %v2822
    %v3079 = vpack.c.bf16 %v2831, %v2831
    %v3080 = vpack.c.bf16 %v2840, %v2840
    %v3081 = vpack.c.bf16 %v2849, %v2849
    %v3082 = vpack.c.bf16 %v2858, %v2858
    %v3083 = vpack.c.bf16 %v2867, %v2867
    %v3084 = vpack.c.bf16 %v2876, %v2876
    %v3085 = vpack.c.bf16 %v2885, %v2885
    %v3086 = vpack.c.bf16 %v2894, %v2894
    %v3087 = vpack.c.bf16 %v2903, %v2903
    %v3088 = vpack.c.bf16 %v2912, %v2912
    %v3089 = vpack.c.bf16 %v2921, %v2921
    %v3090 = vpack.c.bf16 %v2930, %v2930
    %v3091 = vpack.c.bf16 %v2939, %v2939
    %v3092 = vpack.c.bf16 %v2948, %v2948
    %v3093 = vpack.c.bf16 %v2957, %v2957
    %v3094 = vpack.c.bf16 %v2966, %v2966
    %v3095 = vpack.c.bf16 %v2975, %v2975
    %v3096 = vpack.c.bf16 %v2984, %v2984
    %v3097 = vpack.c.bf16 %v2993, %v2993
    %v3098 = vpack.c.bf16 %v3002, %v3002
    %v3099 = vpack.c.bf16 %v3011, %v3011
    %v3100 = vpack.c.bf16 %v3020, %v3020
    %v3101 = vpack.c.bf16 %v3029, %v3029
    %v3102 = vpack.c.bf16 %v3038, %v3038
    %v3103 = vpack.c.bf16 %v3047, %v3047
    %v3104 = vpack.c.bf16 %v3056, %v3056
    %v3105 = vpack.c.bf16 %v3065, %v3065
    %v3106 = vpack.c.bf16 %v3074, %v3074
    %v3107 = vld [vmem:[#allocation5] sm:$0xf]
    %v3108 = vld [vmem:[#allocation5 + $0x4] sm:$0xf]
    %v3109 = vld [vmem:[#allocation5 + $0x8] sm:$0xf]
    %v3110 = vld [vmem:[#allocation5 + $0xc] sm:$0xf]
    %v3111 = vld [vmem:[%s7] sm:$0x1]
    %v3113 = vlaneseq
    %v3114 = vshrl.u32 %v3113, 7
    %v3115 = vsub.s32 0, %v3114
    %v3116 = vrot.slane %v3111, %v3115
    %v3150 = vunpack.c.l.b16 %v3075
    %v3151 = vunpack.c.l.b16 %v3076
    %v3152 = vunpack.c.l.b16 %v3077
    %v3153 = vunpack.c.l.b16 %v3078
    %v3154 = vunpack.c.l.b16 %v3079
    %v3155 = vunpack.c.l.b16 %v3080
    %v3156 = vunpack.c.l.b16 %v3081
    %v3157 = vunpack.c.l.b16 %v3082
    %v3158 = vunpack.c.l.b16 %v3083
    %v3159 = vunpack.c.l.b16 %v3084
    %v3160 = vunpack.c.l.b16 %v3085
    %v3161 = vunpack.c.l.b16 %v3086
    %v3162 = vunpack.c.l.b16 %v3087
    %v3163 = vunpack.c.l.b16 %v3088
    %v3164 = vunpack.c.l.b16 %v3089
    %v3165 = vunpack.c.l.b16 %v3090
    %v3166 = vunpack.c.l.b16 %v3091
    %v3167 = vunpack.c.l.b16 %v3092
    %v3168 = vunpack.c.l.b16 %v3093
    %v3169 = vunpack.c.l.b16 %v3094
    %v3170 = vunpack.c.l.b16 %v3095
    %v3171 = vunpack.c.l.b16 %v3096
    %v3172 = vunpack.c.l.b16 %v3097
    %v3173 = vunpack.c.l.b16 %v3098
    %v3174 = vunpack.c.l.b16 %v3099
    %v3175 = vunpack.c.l.b16 %v3100
    %v3176 = vunpack.c.l.b16 %v3101
    %v3177 = vunpack.c.l.b16 %v3102
    %v3178 = vunpack.c.l.b16 %v3103
    %v3179 = vunpack.c.l.b16 %v3104
    %v3180 = vunpack.c.l.b16 %v3105
    %v3181 = vunpack.c.l.b16 %v3106
    %vm3182 = vcmask 1041409
    %v3183 = vsel %vm3182, %v3151, %v3150
    %vm3184 = vcmask 1042434
    %v3185 = vsel %vm3184, %v3152, %v3183
    %vm3186 = vcmask 1043459
    %v3187 = vsel %vm3186, %v3153, %v3185
    %vm3188 = vcmask 1044484
    %v3189 = vsel %vm3188, %v3154, %v3187
    %vm3190 = vcmask 1045509
    %v3191 = vsel %vm3190, %v3155, %v3189
    %vm3192 = vcmask 1046534
    %v3193 = vsel %vm3192, %v3156, %v3191
    %vm3194 = vcmask 1047559
    %v3195 = vsel %vm3194, %v3157, %v3193
    %v3196 = vsel %vm3182, %v3159, %v3158
    %v3197 = vsel %vm3184, %v3160, %v3196
    %v3198 = vsel %vm3186, %v3161, %v3197
    %v3199 = vsel %vm3188, %v3162, %v3198
    %v3200 = vsel %vm3190, %v3163, %v3199
    %v3201 = vsel %vm3192, %v3164, %v3200
    %v3202 = vsel %vm3194, %v3165, %v3201
    %v3203 = vsel %vm3182, %v3167, %v3166
    %v3204 = vsel %vm3184, %v3168, %v3203
    %v3205 = vsel %vm3186, %v3169, %v3204
    %v3206 = vsel %vm3188, %v3170, %v3205
    %v3207 = vsel %vm3190, %v3171, %v3206
    %v3208 = vsel %vm3192, %v3172, %v3207
    %v3209 = vsel %vm3194, %v3173, %v3208
    %v3210 = vsel %vm3182, %v3175, %v3174
    %v3211 = vsel %vm3184, %v3176, %v3210
    %v3212 = vsel %vm3186, %v3177, %v3211
    %v3213 = vsel %vm3188, %v3178, %v3212
    %v3214 = vsel %vm3190, %v3179, %v3213
    %v3215 = vsel %vm3192, %v3180, %v3214
    %v3216 = vsel %vm3194, %v3181, %v3215
    %v3217 = vpack.c.b16 %v3202, %v3195
    %v3218 = vpack.c.b16 %v3216, %v3209
    %v3223 = vunpack.c.l.b16 %v3107
    %v3224 = vunpack.c.l.b16 %v3108
    %v3225 = vunpack.c.l.b16 %v3109
    %v3226 = vunpack.c.l.b16 %v3110
    %v3227 = vpack.c.b16 %v3224, %v3223
    %v3228 = vpack.c.b16 %v3226, %v3225
    %v3232 = vsel %vm89, %v3217, 0
    %v3235 = vsel %vm89, %v3218, 0
    %3237 = vmatprep.subr.bf16.mxu0 0
    %3238 = vmatpush1.bf16.msra.mxu0 %v3227
    %3239 = vmatprep.subr.bf16.mxu0 0
    %3240 = vmatpush1.bf16.msra.mxu0 %v3228
    %3241 = vmatprep.subr.bf16.mxu0 0
    %3242 = vmatpush1.bf16.msra.mxu0 0
    %3243 = vmatprep.subr.bf16.mxu0 0
    %3244 = vmatpush1.bf16.msra.mxu0 0
    %3245 = vmatprep.subr.bf16.mxu0 0
    %3246 = vmatpush1.bf16.msra.mxu0 0
    %3247 = vmatprep.subr.bf16.mxu0 0
    %3248 = vmatpush1.bf16.msra.mxu0 0
    %3249 = vmatprep.subr.bf16.mxu0 0
    %3250 = vmatpush1.bf16.msra.mxu0 0
    %3251 = vmatprep.subr.bf16.mxu0 0
    %3252 = vmatpush1.bf16.msra.mxu0 0
    %3253 = vmatprep.subr.bf16.mxu0 0
    %3254 = vmatpush1.bf16.msra.mxu0 0
    %3255 = vmatprep.subr.bf16.mxu0 0
    %3256 = vmatpush1.bf16.msra.mxu0 0
    %3257 = vmatprep.subr.bf16.mxu0 0
    %3258 = vmatpush1.bf16.msra.mxu0 0
    %3259 = vmatprep.subr.bf16.mxu0 0
    %3260 = vmatpush1.bf16.msra.mxu0 0
    %3261 = vmatprep.subr.bf16.mxu0 0
    %3262 = vmatpush1.bf16.msra.mxu0 0
    %3263 = vmatprep.subr.bf16.mxu0 0
    %3264 = vmatpush1.bf16.msra.mxu0 0
    %3265 = vmatprep.subr.bf16.mxu0 0
    %3266 = vmatpush1.bf16.msra.mxu0 0
    %3267 = vmatprep.subr.bf16.mxu0 0
    %3268 = vmatpush1.bf16.msra.mxu0 0
    %3269 = vmatprep.mubr.bf16.mxu0 0
    %3270 = vmatmul.mubr.bf16.gmra.mrb[0].mxu0 %v3232
    %v3271 = vpop.f32.mrb[0].mxu0
    %v3272 = vadd.f32 %v3116, %v3271
    %v3273 = vpop.f32.mrb[0].mxu0
    %v3274 = vpop.f32.mrb[0].mxu0
    %v3275 = vadd.f32 %v3116, %v3274
    %v3276 = vpop.f32.mrb[0].mxu0
    %3277 = vmatprep.mubr.bf16.mxu0 0
    %3278 = vmatmul.mubr.bf16.gmra.mrb[0].mxu0 %v3235
    %v3279 = vpop.f32.mrb[0].mxu0
    %v3280 = vadd.f32 %v3116, %v3279
    %v3281 = vpop.f32.mrb[0].mxu0
    %v3282 = vpop.f32.mrb[0].mxu0
    %v3283 = vadd.f32 %v3116, %v3282
    %v3284 = vpop.f32.mrb[0].mxu0
    %3285 = vdwg.mxu0
    %3286 = vst.msk [vmem:[#allocation7] sm:$0xff] %vm89, %v3272
    %3287 = vst.msk [vmem:[#allocation7 + $0x8] sm:$0xff] %vm89, %v3275
    %3288 = vst.msk [vmem:[#allocation7 + $0x10] sm:$0xff] %vm89, %v3280
    %3289 = vst.msk [vmem:[#allocation7 + $0x18] sm:$0xff] %vm89, %v3283
    // Predicated region
    $region42: #{tpu_custom_call.1} parent=1 // pred_check
      _
    $region43: #{tpu_custom_call.1} parent=1 // pred_check_branch
      %3291 = sbr.rel (0) target = $region45
    $region44: #{tpu_custom_call.1} parent=1 // pred_region
      %s3293 = ssub.s32 512, 512
      %3294 = vsyncadd [#allocation4], %s3293
      %s3295 = sshll.u32 [#allocation7], 4
      %s3296 = int_to_ptr.vmem [resolvable:$true] %s3295
      %3301 = dma.vmem_to_hbm [thread:$0]  %s3296, 512, %s8, [#allocation4], 128, 128, 8
    $region45: #{tpu_custom_call.1} parent=1 // pred_fallthru
      _
    // Predicated region
    $region46: #{tpu_custom_call.1} parent=1 // pred_check
      _
    $region47: #{tpu_custom_call.1} parent=1 // pred_check_branch
      %3303 = sbr.rel (0) target = $region49
    $region48: #{tpu_custom_call.1} parent=1 // pred_region
      %3304 = dma.done [#allocation4], 512
    $region49: #{tpu_custom_call.1} parent=1 // pred_fallthru
      _
    %3305 = vsyncpa [#allocation3], 1
    %3306 = vsyncpa [#allocation6], 1
    %3307 = vsyncpa [#allocation4], 1

</llo_original>
